<compile_context>
chip_gen: v7x
topology: tpu7x:2x2x1
jax: 0.10.0
libtpu: 0.0.40
codegen_flags: <defaults>
</compile_context>

<pallas_src>
import numpy as np
import jax
import jax.numpy as jnp
from jax import lax
from jax.experimental import pallas as pl
from jax.experimental.pallas import tpu as pltpu


_OFFS = tuple((ky - 1, kx - 1) for ky in range(3) for kx in range(3))   # 3x3 taps


def _pick_batch_block(n, cap=8):
    for b in range(min(n, cap), 0, -1):
        if n % b == 0:
            return b
    return 1


def _make_kernel(b_blk, cout, w, hw):
    def kernel(x_ref, zmask_ref, pmask_ref, sel_ref, w1_ref, b1_ref,
               w2_ref, b2_ref, lng_ref, lnb_ref, out_ref):
        # x_ref    : (B*cin, hw)       zmask_ref: (9*B*cin, hw)   pmask_ref: (9*B, hw)
        # sel_ref  : (S, hw)           w1_ref   : (B, 9*B*cin)    b1_ref   : (1,) SMEM
        # w2_ref   : (B*cout, 9*B)     b2_ref   : (B*cout, 1)
        # lng_ref / lnb_ref : (1, cout)                           out_ref  : (B, S, cout)
        xf = x_ref[...]                                            # (B*cin, hw)

        # ---- conv1 (Cin -> 1) + folded BN + ReLU: shifted stack + one MXU matmul ----
        zs = []
        for (sy, sx) in _OFFS:
            d = sy * w + sx
            zs.append(xf if d == 0 else pltpu.roll(xf, shift=(-d) % hw, axis=1))
        z = jnp.concatenate(zs, axis=0) * zmask_ref[...]           # (9*B*cin, hw)
        y1 = jnp.dot(w1_ref[...], z, preferred_element_type=jnp.float32)    # (B, hw)
        y1 = jnp.maximum(y1 + b1_ref[0], 0.0)

        # ---- conv2 (1 -> Cout) + folded BN + ReLU: shifted stack + one MXU matmul ----
        ps = []
        for (sy, sx) in _OFFS:
            d = sy * w + sx
            ps.append(y1 if d == 0 else pltpu.roll(y1, shift=(-d) % hw, axis=1))
        p = jnp.concatenate(ps, axis=0) * pmask_ref[...]           # (9*B, hw)
        y2 = jnp.dot(w2_ref[...], p, preferred_element_type=jnp.float32)    # (B*cout, hw)
        y2 = jnp.maximum(y2 + b2_ref[...], 0.0)

        # ---- maxpool 2x2 stride 2: 3 lane-rolls + elementwise max ----
        m01 = jnp.maximum(y2, pltpu.roll(y2, shift=hw - 1, axis=1))
        m23 = jnp.maximum(pltpu.roll(y2, shift=hw - w, axis=1),
                          pltpu.roll(y2, shift=hw - w - 1, axis=1))
        p4 = jnp.maximum(m01, m23)                                 # (B*cout, hw)

        # One matmul compacts the kept (even,even) positions AND transposes:
        #   pooled_t[s, r] = sum_f sel[s, f] * p4[r, f]            -> (S, B*cout)
        pooled_t = lax.dot_general(sel_ref[...], p4,
                                   (((1,), (1,)), ((), ())),
                                   preferred_element_type=jnp.float32)

        # ---- LayerNorm over channels + store (tiny static loop over samples) ----
        lng = lng_ref[...]                                         # (1, cout)
        lnb = lnb_ref[...]
        for b in range(b_blk):
            zb = pooled_t[:, b * cout:(b + 1) * cout]              # (S, cout)
            mu = jnp.mean(zb, axis=-1, keepdims=True)
            var = jnp.mean(jnp.square(zb - mu), axis=-1, keepdims=True)
            nb = (zb - mu) * lax.rsqrt(var + 1e-5)
            out_ref[b, :, :] = (nb * lng + lnb).astype(out_ref.dtype)

    return kernel


def multires_block1_forward(x, params, batch_block=None):
    n, cin, h, w = x.shape
    assert h >= 3 and w >= 3 and h % 2 == 0 and w % 2 == 0, (h, w)
    eps = 1e-5
    hw = h * w
    hh, wh = h // 2, w // 2
    s_out = hh * wh

    w1, b1 = params["w1"], params["b1"]            # (1, cin, 3, 3), (1,)
    g1, be1, m1, v1 = params["bn1"]                # each (1,)
    w2, b2 = params["w2"], params["b2"]            # (cout, 1, 3, 3), (cout,)
    g2, be2, m2, v2 = params["bn2"]                # each (cout,)
    ln_g, ln_b = params["ln_g"], params["ln_b"]    # (cout,), (cout,)
    cout = w2.shape[0]

    b_blk = batch_block or _pick_batch_block(n)
    assert n % b_blk == 0
    num_blocks = n // b_blk

    # ---- glue: fold inference-mode BatchNorm into conv weight / bias ----
    s1 = g1 / jnp.sqrt(v1 + eps)
    w1f = (w1[0] * s1[0]).astype(jnp.float32)                        # (cin, 3, 3)
    b1f = ((b1 - m1) * s1 + be1).reshape(1).astype(jnp.float32)      # (1,)
    s2 = g2 / jnp.sqrt(v2 + eps)
    w2f = (w2[:, 0, :, :] * s2[:, None, None]).astype(jnp.float32)   # (cout, 3, 3)
    b2f = ((b2 - m2) * s2 + be2).astype(jnp.float32)                 # (cout,)

    # per-tap weight layouts: w1_tc[t, c] = w1f[c, ky, kx]; w2_tc[t, o] = w2f[o, ky, kx]
    w1_tc = jnp.transpose(w1f, (1, 2, 0)).reshape(9, cin)
    w2_tc = jnp.transpose(w2f, (1, 2, 0)).reshape(9, cout)
    eye_b = jnp.eye(b_blk, dtype=jnp.float32)
    # block-diagonal matmul weights (batch baked into the K dimension):
    #   w1big[b, (t, b2, c)]   = (b == b2) * w1_tc[t, c]
    #   w2big[(b, o), (t, b2)] = (b == b2) * w2_tc[t, o]
    w1big = jnp.einsum("bd,tc->btdc", eye_b, w1_tc).reshape(b_blk, 9 * b_blk * cin)
    w2big = jnp.einsum("bd,to->botd", eye_b, w2_tc).reshape(b_blk * cout, 9 * b_blk)
    b2col = jnp.tile(b2f, b_blk).reshape(b_blk * cout, 1)
    lng = ln_g.reshape(1, cout).astype(jnp.float32)
    lnb = ln_b.reshape(1, cout).astype(jnp.float32)

    # ---- static (trace-time) constants: zero-pad masks, pool-selection matrix ----
    ys_i = np.arange(hw) // w
    xs_i = np.arange(hw) % w
    mask9 = np.stack(
        [((ys_i + sy >= 0) & (ys_i + sy < h) & (xs_i + sx >= 0) & (xs_i + sx < w))
         for (sy, sx) in _OFFS]).astype(np.float32)                  # (9, hw)
    zmask = jnp.asarray(np.repeat(mask9, b_blk * cin, axis=0))       # (9*B*cin, hw)
    pmask = jnp.asarray(np.repeat(mask9, b_blk, axis=0))             # (9*B, hw)
    sel = np.zeros((s_out, hw), np.float32)
    si = np.arange(s_out)
    sel[si, (2 * (si // wh)) * w + 2 * (si % wh)] = 1.0
    sel = jnp.asarray(sel)

    x_flat = x.reshape(n * cin, hw).astype(jnp.float32)

    flops = 2 * hw * num_blocks * (b_blk * 9 * b_blk * cin
                                   + b_blk * cout * 9 * b_blk
                                   + s_out * b_blk * cout)
    bytes_accessed = 4 * (n * cin * hw + n * s_out * cout
                          + zmask.size + pmask.size + sel.size)

    kernel = _make_kernel(b_blk, cout, w, hw)
    out = pl.pallas_call(
        kernel,
        out_shape=jax.ShapeDtypeStruct((n, s_out, cout), jnp.float32),
        grid_spec=pltpu.PrefetchScalarGridSpec(
            num_scalar_prefetch=0,
            grid=(num_blocks,),
            in_specs=[
                pl.BlockSpec((b_blk * cin, hw), lambda g: (g, 0)),            # x
                pl.BlockSpec((9 * b_blk * cin, hw), lambda g: (0, 0)),        # zmask
                pl.BlockSpec((9 * b_blk, hw), lambda g: (0, 0)),              # pmask
                pl.BlockSpec((s_out, hw), lambda g: (0, 0)),                  # sel
                pl.BlockSpec((b_blk, 9 * b_blk * cin), lambda g: (0, 0)),     # w1big
                pl.BlockSpec(memory_space=pltpu.MemorySpace.SMEM),            # b1f
                pl.BlockSpec((b_blk * cout, 9 * b_blk), lambda g: (0, 0)),    # w2big
                pl.BlockSpec((b_blk * cout, 1), lambda g: (0, 0)),            # b2col
                pl.BlockSpec((1, cout), lambda g: (0, 0)),                    # ln gamma
                pl.BlockSpec((1, cout), lambda g: (0, 0)),                    # ln beta
            ],
            out_specs=pl.BlockSpec((b_blk, s_out, cout), lambda g: (g, 0, 0)),
        ),
        compiler_params=pltpu.CompilerParams(dimension_semantics=("parallel",)),
        cost_estimate=pl.CostEstimate(flops=flops, transcendentals=n * s_out,
                                      bytes_accessed=bytes_accessed),
    )(x_flat, zmask, pmask, sel, w1big, b1f, w2big, b2col, lng, lnb)
    return out                       # (N, S, W) -- already matches flatten(2).transpose(1,2)


def reference_forward(x, params):
    """Pure-JAX reference mirroring the PyTorch forward (inference-mode BN)."""
    eps = 1e-5
    w1, b1 = params["w1"], params["b1"]
    g1, be1, m1, v1 = params["bn1"]
    w2, b2 = params["w2"], params["b2"]
    g2, be2, m2, v2 = params["bn2"]
    ln_g, ln_b = params["ln_g"], params["ln_b"]

    dn = ("NCHW", "OIHW", "NCHW")
    y = lax.conv_general_dilated(x, w1, (1, 1), [(1, 1), (1, 1)], dimension_numbers=dn)
    y = y + b1.reshape(1, -1, 1, 1)
    y = (y - m1.reshape(1, -1, 1, 1)) * (g1 / jnp.sqrt(v1 + eps)).reshape(1, -1, 1, 1) \
        + be1.reshape(1, -1, 1, 1)
    y = jnp.maximum(y, 0.0)

    z = lax.conv_general_dilated(y, w2, (1, 1), [(1, 1), (1, 1)], dimension_numbers=dn)
    z = z + b2.reshape(1, -1, 1, 1)
    z = (z - m2.reshape(1, -1, 1, 1)) * (g2 / jnp.sqrt(v2 + eps)).reshape(1, -1, 1, 1) \
        + be2.reshape(1, -1, 1, 1)
    z = jnp.maximum(z, 0.0)

    p = lax.reduce_window(z, -jnp.inf, lax.max, (1, 1, 2, 2), (1, 1, 2, 2), "VALID")
    n, c, hh, wh = p.shape
    t = p.reshape(n, c, hh * wh).transpose(0, 2, 1)            # (n, s, c)
    mu = t.mean(-1, keepdims=True)
    var = ((t - mu) ** 2).mean(-1, keepdims=True)
    return (t - mu) / jnp.sqrt(var + eps) * ln_g + ln_b


if __name__ == "__main__":
    in_ch, U = 4, 32            # W = alpha * U = 32
    N, H, W_sp = 2, 16, 16
    cout = U

    key = jax.random.PRNGKey(0)
    ks = jax.random.split(key, 16)
    params = {
        "w1": 0.3 * jax.random.normal(ks[0], (1, in_ch, 3, 3), jnp.float32),
        "b1": 0.1 * jax.random.normal(ks[1], (1,), jnp.float32),
        "bn1": (1.0 + 0.1 * jax.random.normal(ks[2], (1,), jnp.float32),
                0.1 * jax.random.normal(ks[3], (1,), jnp.float32),
                0.1 * jax.random.normal(ks[4], (1,), jnp.float32),
                0.5 + jnp.abs(jax.random.normal(ks[5], (1,), jnp.float32))),
        "w2": 0.3 * jax.random.normal(ks[6], (cout, 1, 3, 3), jnp.float32),
        "b2": 0.1 * jax.random.normal(ks[7], (cout,), jnp.float32),
        "bn2": (1.0 + 0.1 * jax.random.normal(ks[8], (cout,), jnp.float32),
                0.1 * jax.random.normal(ks[9], (cout,), jnp.float32),
                0.1 * jax.random.normal(ks[10], (cout,), jnp.float32),
                0.5 + jnp.abs(jax.random.normal(ks[11], (cout,), jnp.float32))),
        "ln_g": 1.0 + 0.1 * jax.random.normal(ks[12], (cout,), jnp.float32),
        "ln_b": 0.1 * jax.random.normal(ks[13], (cout,), jnp.float32),
    }
    x = jax.random.normal(ks[14], (N, in_ch, H, W_sp), jnp.float32)

    out = multires_block1_forward(x, params)
    out = jax.block_until_ready(out)

    assert out.shape == (N, (H // 2) * (W_sp // 2), cout), out.shape
    ref = reference_forward(x, params)
    np.testing.assert_allclose(np.asarray(out), np.asarray(ref), rtol=2e-3, atol=2e-3)
    print("KERNEL_OK")
</pallas_src>

<mosaic_0001>
module attributes {stable_mosaic.version = 11 : i64} {
  func.func @kernel(%arg0: i32, %arg1: memref<8x256xf32, #tpu.memory_space<vmem>>, %arg2: memref<72x256xf32, #tpu.memory_space<vmem>>, %arg3: memref<18x256xf32, #tpu.memory_space<vmem>>, %arg4: memref<64x256xf32, #tpu.memory_space<vmem>>, %arg5: memref<2x72xf32, #tpu.memory_space<vmem>>, %arg6: memref<1xf32, #tpu.memory_space<smem>>, %arg7: memref<64x18xf32, #tpu.memory_space<vmem>>, %arg8: memref<64x1xf32, #tpu.memory_space<vmem>>, %arg9: memref<1x32xf32, #tpu.memory_space<vmem>>, %arg10: memref<1x32xf32, #tpu.memory_space<vmem>>, %arg11: memref<2x64x32xf32, #tpu.memory_space<vmem>>) attributes {dimension_semantics = [#tpu.dimension_semantics<parallel>], iteration_bounds = array<i64: 1>, scalar_prefetch = 0 : i64, scratch_operands = 0 : i64, tpu.core_type = #tpu.core_type<tc>, window_params = [{transform_indices = @transform_0, window_bounds = array<i64: 8, 256>}, {pipeline_mode = #tpu.pipeline_mode<synchronous>, transform_indices = @transform_1, window_bounds = array<i64: 72, 256>}, {pipeline_mode = #tpu.pipeline_mode<synchronous>, transform_indices = @transform_2, window_bounds = array<i64: 18, 256>}, {pipeline_mode = #tpu.pipeline_mode<synchronous>, transform_indices = @transform_3, window_bounds = array<i64: 64, 256>}, {pipeline_mode = #tpu.pipeline_mode<synchronous>, transform_indices = @transform_4, window_bounds = array<i64: 2, 72>}, {transform_indices = @transform_5, window_bounds = array<i64: 1>}, {pipeline_mode = #tpu.pipeline_mode<synchronous>, transform_indices = @transform_6, window_bounds = array<i64: 64, 18>}, {pipeline_mode = #tpu.pipeline_mode<synchronous>, transform_indices = @transform_7, window_bounds = array<i64: 64, 1>}, {pipeline_mode = #tpu.pipeline_mode<synchronous>, transform_indices = @transform_8, window_bounds = array<i64: 1, 32>}, {pipeline_mode = #tpu.pipeline_mode<synchronous>, transform_indices = @transform_9, window_bounds = array<i64: 1, 32>}, {transform_indices = @transform_10, window_bounds = array<i64: 2, 64, 32>}]} {
    %c0 = arith.constant 0 : index
    %c0_0 = arith.constant 0 : index
    %0 = vector.load %arg1[%c0, %c0_0] : memref<8x256xf32, #tpu.memory_space<vmem>>, vector<8x256xf32>
    %c17_i32 = arith.constant 17 : i32
    %1 = tpu.dynamic_rotate %0 by %c17_i32 dim 1 : vector<8x256xf32>, i32 -> vector<8x256xf32>
    %c16_i32 = arith.constant 16 : i32
    %2 = tpu.dynamic_rotate %0 by %c16_i32 dim 1 : vector<8x256xf32>, i32 -> vector<8x256xf32>
    %c15_i32 = arith.constant 15 : i32
    %3 = tpu.dynamic_rotate %0 by %c15_i32 dim 1 : vector<8x256xf32>, i32 -> vector<8x256xf32>
    %c1_i32 = arith.constant 1 : i32
    %4 = tpu.dynamic_rotate %0 by %c1_i32 dim 1 : vector<8x256xf32>, i32 -> vector<8x256xf32>
    %c255_i32 = arith.constant 255 : i32
    %5 = tpu.dynamic_rotate %0 by %c255_i32 dim 1 : vector<8x256xf32>, i32 -> vector<8x256xf32>
    %c241_i32 = arith.constant 241 : i32
    %6 = tpu.dynamic_rotate %0 by %c241_i32 dim 1 : vector<8x256xf32>, i32 -> vector<8x256xf32>
    %c240_i32 = arith.constant 240 : i32
    %7 = tpu.dynamic_rotate %0 by %c240_i32 dim 1 : vector<8x256xf32>, i32 -> vector<8x256xf32>
    %c239_i32 = arith.constant 239 : i32
    %8 = tpu.dynamic_rotate %0 by %c239_i32 dim 1 : vector<8x256xf32>, i32 -> vector<8x256xf32>
    %9 = tpu.concatenate %1, %2, %3, %4, %0, %5, %6, %7, %8 in 0 : vector<8x256xf32>, vector<8x256xf32>, vector<8x256xf32>, vector<8x256xf32>, vector<8x256xf32>, vector<8x256xf32>, vector<8x256xf32>, vector<8x256xf32>, vector<8x256xf32> -> vector<72x256xf32>
    %c0_1 = arith.constant 0 : index
    %c0_2 = arith.constant 0 : index
    %10 = vector.load %arg2[%c0_1, %c0_2] : memref<72x256xf32, #tpu.memory_space<vmem>>, vector<72x256xf32>
    %11 = arith.mulf %9, %10 : vector<72x256xf32>
    %c0_3 = arith.constant 0 : index
    %c0_4 = arith.constant 0 : index
    %12 = vector.load %arg5[%c0_3, %c0_4] : memref<2x72xf32, #tpu.memory_space<vmem>>, vector<2x72xf32>
    %cst = arith.constant dense<0.000000e+00> : vector<2x256xf32>
    %13 = tpu.matmul %12, %11, %cst {dimension_numbers = #tpu.dot_dimension_numbers<[1], [0], [0], [1], [0, 0, 1, 1], [], []>} : vector<2x72xf32>, vector<72x256xf32>, vector<2x256xf32> -> vector<2x256xf32>
    %c0_5 = arith.constant 0 : index
    %14 = memref.load %arg6[%c0_5] : memref<1xf32, #tpu.memory_space<smem>>
    %15 = vector.broadcast %14 : f32 to vector<2x256xf32>
    %16 = arith.addf %13, %15 : vector<2x256xf32>
    %cst_6 = arith.constant 0.000000e+00 : f32
    %17 = vector.broadcast %cst_6 : f32 to vector<2x256xf32>
    %18 = arith.maximumf %16, %17 : vector<2x256xf32>
    %c17_i32_7 = arith.constant 17 : i32
    %19 = tpu.dynamic_rotate %18 by %c17_i32_7 dim 1 : vector<2x256xf32>, i32 -> vector<2x256xf32>
    %c16_i32_8 = arith.constant 16 : i32
    %20 = tpu.dynamic_rotate %18 by %c16_i32_8 dim 1 : vector<2x256xf32>, i32 -> vector<2x256xf32>
    %c15_i32_9 = arith.constant 15 : i32
    %21 = tpu.dynamic_rotate %18 by %c15_i32_9 dim 1 : vector<2x256xf32>, i32 -> vector<2x256xf32>
    %c1_i32_10 = arith.constant 1 : i32
    %22 = tpu.dynamic_rotate %18 by %c1_i32_10 dim 1 : vector<2x256xf32>, i32 -> vector<2x256xf32>
    %c255_i32_11 = arith.constant 255 : i32
    %23 = tpu.dynamic_rotate %18 by %c255_i32_11 dim 1 : vector<2x256xf32>, i32 -> vector<2x256xf32>
    %c241_i32_12 = arith.constant 241 : i32
    %24 = tpu.dynamic_rotate %18 by %c241_i32_12 dim 1 : vector<2x256xf32>, i32 -> vector<2x256xf32>
    %c240_i32_13 = arith.constant 240 : i32
    %25 = tpu.dynamic_rotate %18 by %c240_i32_13 dim 1 : vector<2x256xf32>, i32 -> vector<2x256xf32>
    %c239_i32_14 = arith.constant 239 : i32
    %26 = tpu.dynamic_rotate %18 by %c239_i32_14 dim 1 : vector<2x256xf32>, i32 -> vector<2x256xf32>
    %27 = tpu.concatenate %19, %20, %21, %22, %18, %23, %24, %25, %26 in 0 : vector<2x256xf32>, vector<2x256xf32>, vector<2x256xf32>, vector<2x256xf32>, vector<2x256xf32>, vector<2x256xf32>, vector<2x256xf32>, vector<2x256xf32>, vector<2x256xf32> -> vector<18x256xf32>
    %c0_15 = arith.constant 0 : index
    %c0_16 = arith.constant 0 : index
    %28 = vector.load %arg3[%c0_15, %c0_16] : memref<18x256xf32, #tpu.memory_space<vmem>>, vector<18x256xf32>
    %29 = arith.mulf %27, %28 : vector<18x256xf32>
    %c0_17 = arith.constant 0 : index
    %c0_18 = arith.constant 0 : index
    %30 = vector.load %arg7[%c0_17, %c0_18] : memref<64x18xf32, #tpu.memory_space<vmem>>, vector<64x18xf32>
    %cst_19 = arith.constant dense<0.000000e+00> : vector<64x256xf32>
    %31 = tpu.matmul %30, %29, %cst_19 {dimension_numbers = #tpu.dot_dimension_numbers<[1], [0], [0], [1], [0, 0, 1, 1], [], []>} : vector<64x18xf32>, vector<18x256xf32>, vector<64x256xf32> -> vector<64x256xf32>
    %c0_20 = arith.constant 0 : index
    %c0_21 = arith.constant 0 : index
    %32 = vector.load %arg8[%c0_20, %c0_21] : memref<64x1xf32, #tpu.memory_space<vmem>>, vector<64x1xf32>
    %33 = vector.broadcast %32 : vector<64x1xf32> to vector<64x256xf32>
    %34 = arith.addf %31, %33 : vector<64x256xf32>
    %cst_22 = arith.constant 0.000000e+00 : f32
    %35 = vector.broadcast %cst_22 : f32 to vector<64x256xf32>
    %36 = arith.maximumf %34, %35 : vector<64x256xf32>
    %c255_i32_23 = arith.constant 255 : i32
    %37 = tpu.dynamic_rotate %36 by %c255_i32_23 dim 1 : vector<64x256xf32>, i32 -> vector<64x256xf32>
    %38 = arith.maximumf %36, %37 : vector<64x256xf32>
    %c240_i32_24 = arith.constant 240 : i32
    %39 = tpu.dynamic_rotate %36 by %c240_i32_24 dim 1 : vector<64x256xf32>, i32 -> vector<64x256xf32>
    %c239_i32_25 = arith.constant 239 : i32
    %40 = tpu.dynamic_rotate %36 by %c239_i32_25 dim 1 : vector<64x256xf32>, i32 -> vector<64x256xf32>
    %41 = arith.maximumf %39, %40 : vector<64x256xf32>
    %42 = arith.maximumf %38, %41 : vector<64x256xf32>
    %c0_26 = arith.constant 0 : index
    %c0_27 = arith.constant 0 : index
    %43 = vector.load %arg4[%c0_26, %c0_27] : memref<64x256xf32, #tpu.memory_space<vmem>>, vector<64x256xf32>
    %cst_28 = arith.constant dense<0.000000e+00> : vector<64x64xf32>
    %44 = tpu.matmul %43, %42, %cst_28 {dimension_numbers = #tpu.dot_dimension_numbers<[1], [1], [0], [0], [0, 0, 1, 0], [], []>} : vector<64x256xf32>, vector<64x256xf32>, vector<64x64xf32> -> vector<64x64xf32>
    %c0_29 = arith.constant 0 : index
    %c0_30 = arith.constant 0 : index
    %45 = vector.load %arg9[%c0_29, %c0_30] : memref<1x32xf32, #tpu.memory_space<vmem>>, vector<1x32xf32>
    %c0_31 = arith.constant 0 : index
    %c0_32 = arith.constant 0 : index
    %46 = vector.load %arg10[%c0_31, %c0_32] : memref<1x32xf32, #tpu.memory_space<vmem>>, vector<1x32xf32>
    %47 = vector.extract_strided_slice %44 {offsets = [0, 0], sizes = [64, 32], strides = [1, 1]} : vector<64x64xf32> to vector<64x32xf32>
    %cst_33 = arith.constant dense<0.000000e+00> : vector<64xf32>
    %48 = vector.multi_reduction <add>, %47, %cst_33 [1] : vector<64x32xf32> to vector<64xf32>
    %49 = vector.shape_cast %48 : vector<64xf32> to vector<64x1xf32>
    %cst_34 = arith.constant 3.200000e+01 : f32
    %50 = vector.broadcast %cst_34 : f32 to vector<64x1xf32>
    %51 = arith.divf %49, %50 : vector<64x1xf32>
    %52 = vector.broadcast %51 : vector<64x1xf32> to vector<64x32xf32>
    %53 = arith.subf %47, %52 : vector<64x32xf32>
    %54 = arith.mulf %53, %53 : vector<64x32xf32>
    %cst_35 = arith.constant dense<0.000000e+00> : vector<64xf32>
    %55 = vector.multi_reduction <add>, %54, %cst_35 [1] : vector<64x32xf32> to vector<64xf32>
    %56 = vector.shape_cast %55 : vector<64xf32> to vector<64x1xf32>
    %cst_36 = arith.constant 3.200000e+01 : f32
    %57 = vector.broadcast %cst_36 : f32 to vector<64x1xf32>
    %58 = arith.divf %56, %57 : vector<64x1xf32>
    %59 = vector.broadcast %51 : vector<64x1xf32> to vector<64x32xf32>
    %60 = arith.subf %47, %59 : vector<64x32xf32>
    %cst_37 = arith.constant 9.99999974E-6 : f32
    %61 = vector.broadcast %cst_37 : f32 to vector<64x1xf32>
    %62 = arith.addf %58, %61 : vector<64x1xf32>
    %63 = math.rsqrt %62 : vector<64x1xf32>
    %64 = vector.broadcast %63 : vector<64x1xf32> to vector<64x32xf32>
    %65 = arith.mulf %60, %64 : vector<64x32xf32>
    %66 = vector.broadcast %45 : vector<1x32xf32> to vector<64x32xf32>
    %67 = arith.mulf %65, %66 : vector<64x32xf32>
    %68 = vector.broadcast %46 : vector<1x32xf32> to vector<64x32xf32>
    %69 = arith.addf %67, %68 : vector<64x32xf32>
    %c0_38 = arith.constant 0 : index
    %c0_39 = arith.constant 0 : index
    %c0_40 = arith.constant 0 : index
    %70 = vector.load %arg11[%c0_38, %c0_39, %c0_40] : memref<2x64x32xf32, #tpu.memory_space<vmem>>, vector<1x64x32xf32>
    %71 = vector.shape_cast %70 : vector<1x64x32xf32> to vector<64x32xf32>
    %72 = vector.shape_cast %69 : vector<64x32xf32> to vector<1x64x32xf32>
    tpu.vector_store %arg11[%c0_38, %c0_39, %c0_40], %72 {strides = array<i32>} : memref<2x64x32xf32, #tpu.memory_space<vmem>>, vector<1x64x32xf32>,
    %73 = vector.extract_strided_slice %44 {offsets = [0, 32], sizes = [64, 32], strides = [1, 1]} : vector<64x64xf32> to vector<64x32xf32>
    %cst_41 = arith.constant dense<0.000000e+00> : vector<64xf32>
    %74 = vector.multi_reduction <add>, %73, %cst_41 [1] : vector<64x32xf32> to vector<64xf32>
    %75 = vector.shape_cast %74 : vector<64xf32> to vector<64x1xf32>
    %cst_42 = arith.constant 3.200000e+01 : f32
    %76 = vector.broadcast %cst_42 : f32 to vector<64x1xf32>
    %77 = arith.divf %75, %76 : vector<64x1xf32>
    %78 = vector.broadcast %77 : vector<64x1xf32> to vector<64x32xf32>
    %79 = arith.subf %73, %78 : vector<64x32xf32>
    %80 = arith.mulf %79, %79 : vector<64x32xf32>
    %cst_43 = arith.constant dense<0.000000e+00> : vector<64xf32>
    %81 = vector.multi_reduction <add>, %80, %cst_43 [1] : vector<64x32xf32> to vector<64xf32>
    %82 = vector.shape_cast %81 : vector<64xf32> to vector<64x1xf32>
    %cst_44 = arith.constant 3.200000e+01 : f32
    %83 = vector.broadcast %cst_44 : f32 to vector<64x1xf32>
    %84 = arith.divf %82, %83 : vector<64x1xf32>
    %85 = vector.broadcast %77 : vector<64x1xf32> to vector<64x32xf32>
    %86 = arith.subf %73, %85 : vector<64x32xf32>
    %cst_45 = arith.constant 9.99999974E-6 : f32
    %87 = vector.broadcast %cst_45 : f32 to vector<64x1xf32>
    %88 = arith.addf %84, %87 : vector<64x1xf32>
    %89 = math.rsqrt %88 : vector<64x1xf32>
    %90 = vector.broadcast %89 : vector<64x1xf32> to vector<64x32xf32>
    %91 = arith.mulf %86, %90 : vector<64x32xf32>
    %92 = vector.broadcast %45 : vector<1x32xf32> to vector<64x32xf32>
    %93 = arith.mulf %91, %92 : vector<64x32xf32>
    %94 = vector.broadcast %46 : vector<1x32xf32> to vector<64x32xf32>
    %95 = arith.addf %93, %94 : vector<64x32xf32>
    %c1 = arith.constant 1 : index
    %c0_46 = arith.constant 0 : index
    %c0_47 = arith.constant 0 : index
    %96 = vector.load %arg11[%c1, %c0_46, %c0_47] : memref<2x64x32xf32, #tpu.memory_space<vmem>>, vector<1x64x32xf32>
    %97 = vector.shape_cast %96 : vector<1x64x32xf32> to vector<64x32xf32>
    %98 = vector.shape_cast %95 : vector<64x32xf32> to vector<1x64x32xf32>
    tpu.vector_store %arg11[%c1, %c0_46, %c0_47], %98 {strides = array<i32>} : memref<2x64x32xf32, #tpu.memory_space<vmem>>, vector<1x64x32xf32>,
    return
  }
  func.func @transform_0(%arg0: i32) -> (i32, i32) {
    %c0_i32 = arith.constant 0 : i32
    %c0_i32_0 = arith.constant 0 : i32
    return %arg0, %c0_i32 : i32, i32
  }
  func.func @transform_1(%arg0: i32) -> (i32, i32) {
    %c0_i32 = arith.constant 0 : i32
    %c0_i32_0 = arith.constant 0 : i32
    %c0_i32_1 = arith.constant 0 : i32
    return %c0_i32, %c0_i32_0 : i32, i32
  }
  func.func @transform_2(%arg0: i32) -> (i32, i32) {
    %c0_i32 = arith.constant 0 : i32
    %c0_i32_0 = arith.constant 0 : i32
    %c0_i32_1 = arith.constant 0 : i32
    return %c0_i32, %c0_i32_0 : i32, i32
  }
  func.func @transform_3(%arg0: i32) -> (i32, i32) {
    %c0_i32 = arith.constant 0 : i32
    %c0_i32_0 = arith.constant 0 : i32
    %c0_i32_1 = arith.constant 0 : i32
    return %c0_i32, %c0_i32_0 : i32, i32
  }
  func.func @transform_4(%arg0: i32) -> (i32, i32) {
    %c0_i32 = arith.constant 0 : i32
    %c0_i32_0 = arith.constant 0 : i32
    %c0_i32_1 = arith.constant 0 : i32
    return %c0_i32, %c0_i32_0 : i32, i32
  }
  func.func @transform_5(%arg0: i32) -> i32 {
    %c0_i32 = arith.constant 0 : i32
    %c0_i32_0 = arith.constant 0 : i32
    return %c0_i32 : i32
  }
  func.func @transform_6(%arg0: i32) -> (i32, i32) {
    %c0_i32 = arith.constant 0 : i32
    %c0_i32_0 = arith.constant 0 : i32
    %c0_i32_1 = arith.constant 0 : i32
    return %c0_i32, %c0_i32_0 : i32, i32
  }
  func.func @transform_7(%arg0: i32) -> (i32, i32) {
    %c0_i32 = arith.constant 0 : i32
    %c0_i32_0 = arith.constant 0 : i32
    %c0_i32_1 = arith.constant 0 : i32
    return %c0_i32, %c0_i32_0 : i32, i32
  }
  func.func @transform_8(%arg0: i32) -> (i32, i32) {
    %c0_i32 = arith.constant 0 : i32
    %c0_i32_0 = arith.constant 0 : i32
    %c0_i32_1 = arith.constant 0 : i32
    return %c0_i32, %c0_i32_0 : i32, i32
  }
  func.func @transform_9(%arg0: i32) -> (i32, i32) {
    %c0_i32 = arith.constant 0 : i32
    %c0_i32_0 = arith.constant 0 : i32
    %c0_i32_1 = arith.constant 0 : i32
    return %c0_i32, %c0_i32_0 : i32, i32
  }
  func.func @transform_10(%arg0: i32) -> (i32, i32, i32) {
    %c0_i32 = arith.constant 0 : i32
    %c0_i32_0 = arith.constant 0 : i32
    %c0_i32_1 = arith.constant 0 : i32
    return %arg0, %c0_i32, %c0_i32_0 : i32, i32, i32
  }
}

</mosaic_0001>

<llo_original>
// kernel: tpu_custom_call.1
$region0: #{tpu_custom_call.1}
  #allocation0 [shape = 'u32[]', space=smem, size = 0x4, offset = 0x4, fixed_abs, tag = 'smem constant byte address 0x4 - core index']
  #allocation1 [shape = 'u32[144,128]{1,0:T(1,128)}', space=vmem, size = 0x12000, scoped, tag = 'internal scratch']
  #allocation2 [shape = 'f32[1]{0:T(128)S(6)}', space=smem, size = 0x200, scoped, tag = 'scoped memory for tpu_custom_call.1']
  %s0 = inlined_call_operand.vmem [shape: f32[8,256], index: 0, kind: input, shape index: {}]
  %s1 = inlined_call_operand.vmem [shape: f32[72,256], index: 1, kind: input, shape index: {}]
  %s2 = inlined_call_operand.hbm [shape: f32[18,256], index: 2, kind: input, shape index: {}]
  %s3 = inlined_call_operand.hbm [shape: f32[64,256], index: 3, kind: input, shape index: {}]
  %s4 = inlined_call_operand.vmem [shape: f32[2,72], index: 4, kind: input, shape index: {}]
  %s5 = inlined_call_operand.<no memory space> [shape: f32[1], index: 5, kind: input, shape index: {}]
  %s6 = inlined_call_operand.vmem [shape: f32[64,18], index: 6, kind: input, shape index: {}]
  %s7 = inlined_call_operand.vmem [shape: f32[64,1], index: 7, kind: input, shape index: {}]
  %s8 = inlined_call_operand.vmem [shape: f32[1,32], index: 8, kind: input, shape index: {}]
  %s9 = inlined_call_operand.vmem [shape: f32[1,32], index: 9, kind: input, shape index: {}]
  %s10 = inlined_call_operand.vmem [shape: f32[2,64,32], index: 10, kind: output, shape index: {}]
  %s11 = sld [smem:[#allocation0]]
  $region58: #{tpu_custom_call.1} parent=0
    _
  %s13 = ssub.s32 1, %s11
  %s14 = scalar_select 0, %s13, %s11
  %15 = sst [smem:[#allocation2]] %s5
  $region1: #{tpu_custom_call.1} parent=0
    #allocation3 [shape = 'u8[24576]{0}', space=vmem, size = 0x6000, scoped, tag = 'input window, operand 2, single buffered']
    #allocation4 [shape = 's32[1]{0}', space=sflag, size = 0x4, scoped, tag = 'scoped memory for tpu_custom_call.1']
    #allocation5 [shape = 'u8[65536]{0}', space=vmem, size = 0x10000, scoped, tag = 'input window, operand 3, single buffered']
    #allocation6 [shape = 's32[1]{0}', space=sflag, size = 0x4, scoped, tag = 'scoped memory for tpu_custom_call.1']
    %16 = vsyncpa [#allocation4], 0
    %17 = vsyncpa [#allocation6], 0
    // Predicated region
    $region2: #{tpu_custom_call.1} parent=1 // pred_check
      _
    $region3: #{tpu_custom_call.1} parent=1 // pred_check_branch
      %19 = sbr.rel (0) target = $region5
    $region4: #{tpu_custom_call.1} parent=1 // pred_region
      _
    $region5: #{tpu_custom_call.1} parent=1 // pred_fallthru
      _
    // Predicated region
    $region6: #{tpu_custom_call.1} parent=1 // pred_check
      _
    $region7: #{tpu_custom_call.1} parent=1 // pred_check_branch
      %21 = sbr.rel (0) target = $region9
    $region8: #{tpu_custom_call.1} parent=1 // pred_region
      _
    $region9: #{tpu_custom_call.1} parent=1 // pred_fallthru
      _
    // Predicated region
    $region10: #{tpu_custom_call.1} parent=1 // pred_check
      _
    $region11: #{tpu_custom_call.1} parent=1 // pred_check_branch
      %23 = sbr.rel (0) target = $region13
    $region12: #{tpu_custom_call.1} parent=1 // pred_region
      %s25 = ssub.s32 768, 768
      %26 = vsyncadd [#allocation4], %s25
      %s27 = sshll.u32 [#allocation3], 4
      %s28 = int_to_ptr.vmem [resolvable:$true] %s27
      %33 = dma.hbm_to_vmem [thread:$0]  %s2, 768, %s28, [#allocation4], 256, 256, 16
    $region13: #{tpu_custom_call.1} parent=1 // pred_fallthru
      _
    // Predicated region
    $region14: #{tpu_custom_call.1} parent=1 // pred_check
      _
    $region15: #{tpu_custom_call.1} parent=1 // pred_check_branch
      %35 = sbr.rel (0) target = $region17
    $region16: #{tpu_custom_call.1} parent=1 // pred_region
      %s37 = ssub.s32 2048, 2048
      %38 = vsyncadd [#allocation6], %s37
      %s39 = sshll.u32 [#allocation5], 4
      %s40 = int_to_ptr.vmem [resolvable:$true] %s39
      %45 = dma.hbm_to_vmem [thread:$0]  %s3, 2048, %s40, [#allocation6], 256, 256, 16
    $region17: #{tpu_custom_call.1} parent=1 // pred_fallthru
      _
    // Predicated region
    $region18: #{tpu_custom_call.1} parent=1 // pred_check
      _
    $region19: #{tpu_custom_call.1} parent=1 // pred_check_branch
      %47 = sbr.rel (0) target = $region21
    $region20: #{tpu_custom_call.1} parent=1 // pred_region
      _
    $region21: #{tpu_custom_call.1} parent=1 // pred_fallthru
      _
    // Predicated region
    $region22: #{tpu_custom_call.1} parent=1 // pred_check
      _
    $region23: #{tpu_custom_call.1} parent=1 // pred_check_branch
      %49 = sbr.rel (0) target = $region25
    $region24: #{tpu_custom_call.1} parent=1 // pred_region
      _
    $region25: #{tpu_custom_call.1} parent=1 // pred_fallthru
      _
    // Predicated region
    $region26: #{tpu_custom_call.1} parent=1 // pred_check
      _
    $region27: #{tpu_custom_call.1} parent=1 // pred_check_branch
      %51 = sbr.rel (0) target = $region29
    $region28: #{tpu_custom_call.1} parent=1 // pred_region
      _
    $region29: #{tpu_custom_call.1} parent=1 // pred_fallthru
      _
    // Predicated region
    $region30: #{tpu_custom_call.1} parent=1 // pred_check
      _
    $region31: #{tpu_custom_call.1} parent=1 // pred_check_branch
      %53 = sbr.rel (0) target = $region33
    $region32: #{tpu_custom_call.1} parent=1 // pred_region
      _
    $region33: #{tpu_custom_call.1} parent=1 // pred_fallthru
      _
    // Predicated region
    $region34: #{tpu_custom_call.1} parent=1 // pred_check
      _
    $region35: #{tpu_custom_call.1} parent=1 // pred_check_branch
      %55 = sbr.rel (0) target = $region37
    $region36: #{tpu_custom_call.1} parent=1 // pred_region
      _
    $region37: #{tpu_custom_call.1} parent=1 // pred_fallthru
      _
    // Predicated region
    $region38: #{tpu_custom_call.1} parent=1 // pred_check
      _
    $region39: #{tpu_custom_call.1} parent=1 // pred_check_branch
      %57 = sbr.rel (0) target = $region41
    $region40: #{tpu_custom_call.1} parent=1 // pred_region
      _
    $region41: #{tpu_custom_call.1} parent=1 // pred_fallthru
      _
    // Predicated region
    $region42: #{tpu_custom_call.1} parent=1 // pred_check
      _
    $region43: #{tpu_custom_call.1} parent=1 // pred_check_branch
      %59 = sbr.rel (0) target = $region45
    $region44: #{tpu_custom_call.1} parent=1 // pred_region
      %60 = dma.done [#allocation4], 768
    $region45: #{tpu_custom_call.1} parent=1 // pred_fallthru
      _
    // Predicated region
    $region46: #{tpu_custom_call.1} parent=1 // pred_check
      _
    $region47: #{tpu_custom_call.1} parent=1 // pred_check_branch
      %62 = sbr.rel (0) target = $region49
    $region48: #{tpu_custom_call.1} parent=1 // pred_region
      %63 = dma.done [#allocation6], 2048
    $region49: #{tpu_custom_call.1} parent=1 // pred_fallthru
      _
    %v64 = vld [vmem:[%s0] sm:$0xff]
    %v65 = vld [vmem:[%s0 + $0x8] sm:$0xff]
    %66 = vrot.lane.b32.xlu0 %v64, 17
    %v67 = vpop.permute.xlu0 %66
    %68 = vrot.lane.b32.xlu0 %v65, 17
    %v69 = vpop.permute.xlu0 %68
    %v70 = vlaneseq
    %v71 = vand.u32 %v70, 127
    %vm72 = vcmp.lt.s32.totalorder %v71, 17
    %v73 = vsel %vm72, %v67, %v69
    %v74 = vsel %vm72, %v69, %v67
    %75 = vrot.lane.b32.xlu0 %v64, 16
    %v76 = vpop.permute.xlu0 %75
    %77 = vrot.lane.b32.xlu0 %v65, 16
    %v78 = vpop.permute.xlu0 %77
    %vm79 = vcmp.lt.s32.totalorder %v71, 16
    %v80 = vsel %vm79, %v76, %v78
    %v81 = vsel %vm79, %v78, %v76
    %82 = vrot.lane.b32.xlu0 %v64, 15
    %v83 = vpop.permute.xlu0 %82
    %84 = vrot.lane.b32.xlu0 %v65, 15
    %v85 = vpop.permute.xlu0 %84
    %vm86 = vcmp.lt.s32.totalorder %v71, 15
    %v87 = vsel %vm86, %v83, %v85
    %v88 = vsel %vm86, %v85, %v83
    %89 = vrot.lane.b32.xlu0 %v64, 1
    %v90 = vpop.permute.xlu0 %89
    %91 = vrot.lane.b32.xlu0 %v65, 1
    %v92 = vpop.permute.xlu0 %91
    %vm93 = vcmp.lt.s32.totalorder %v71, 1
    %v94 = vsel %vm93, %v90, %v92
    %v95 = vsel %vm93, %v92, %v90
    %96 = vrot.lane.b32.xlu0 %v64, 127
    %v97 = vpop.permute.xlu0 %96
    %98 = vrot.lane.b32.xlu0 %v65, 127
    %v99 = vpop.permute.xlu0 %98
    %vm100 = vcmp.lt.s32.totalorder %v71, 127
    %v101 = vsel %vm100, %v97, %v99
    %v102 = vsel %vm100, %v99, %v97
    %103 = vrot.lane.b32.xlu0 %v64, 113
    %v104 = vpop.permute.xlu0 %103
    %105 = vrot.lane.b32.xlu0 %v65, 113
    %v106 = vpop.permute.xlu0 %105
    %vm107 = vcmp.lt.s32.totalorder %v71, 113
    %v108 = vsel %vm107, %v104, %v106
    %v109 = vsel %vm107, %v106, %v104
    %110 = vrot.lane.b32.xlu0 %v64, 112
    %v111 = vpop.permute.xlu0 %110
    %112 = vrot.lane.b32.xlu0 %v65, 112
    %v113 = vpop.permute.xlu0 %112
    %vm114 = vcmp.lt.s32.totalorder %v71, 112
    %v115 = vsel %vm114, %v111, %v113
    %v116 = vsel %vm114, %v113, %v111
    %117 = vrot.lane.b32.xlu0 %v64, 111
    %v118 = vpop.permute.xlu0 %117
    %119 = vrot.lane.b32.xlu0 %v65, 111
    %v120 = vpop.permute.xlu0 %119
    %vm121 = vcmp.lt.s32.totalorder %v71, 111
    %v122 = vsel %vm121, %v118, %v120
    %v123 = vsel %vm121, %v120, %v118
    %v124 = vld [vmem:[%s1] sm:$0xff]
    %v125 = vld [vmem:[%s1 + $0x8] sm:$0xff]
    %v126 = vld [vmem:[%s1 + $0x10] sm:$0xff]
    %v127 = vld [vmem:[%s1 + $0x18] sm:$0xff]
    %v128 = vld [vmem:[%s1 + $0x20] sm:$0xff]
    %v129 = vld [vmem:[%s1 + $0x28] sm:$0xff]
    %v130 = vld [vmem:[%s1 + $0x30] sm:$0xff]
    %v131 = vld [vmem:[%s1 + $0x38] sm:$0xff]
    %v132 = vld [vmem:[%s1 + $0x40] sm:$0xff]
    %v133 = vld [vmem:[%s1 + $0x48] sm:$0xff]
    %v134 = vld [vmem:[%s1 + $0x50] sm:$0xff]
    %v135 = vld [vmem:[%s1 + $0x58] sm:$0xff]
    %v136 = vld [vmem:[%s1 + $0x60] sm:$0xff]
    %v137 = vld [vmem:[%s1 + $0x68] sm:$0xff]
    %v138 = vld [vmem:[%s1 + $0x70] sm:$0xff]
    %v139 = vld [vmem:[%s1 + $0x78] sm:$0xff]
    %v140 = vld [vmem:[%s1 + $0x80] sm:$0xff]
    %v141 = vld [vmem:[%s1 + $0x88] sm:$0xff]
    %v142 = vmul.f32 %v74, %v124
    %v143 = vmul.f32 %v73, %v125
    %v144 = vmul.f32 %v81, %v126
    %v145 = vmul.f32 %v80, %v127
    %v146 = vmul.f32 %v88, %v128
    %v147 = vmul.f32 %v87, %v129
    %v148 = vmul.f32 %v95, %v130
    %v149 = vmul.f32 %v94, %v131
    %v150 = vmul.f32 %v64, %v132
    %v151 = vmul.f32 %v65, %v133
    %v152 = vmul.f32 %v101, %v134
    %v153 = vmul.f32 %v102, %v135
    %v154 = vmul.f32 %v108, %v136
    %v155 = vmul.f32 %v109, %v137
    %v156 = vmul.f32 %v115, %v138
    %v157 = vmul.f32 %v116, %v139
    %v158 = vmul.f32 %v122, %v140
    %v159 = vmul.f32 %v123, %v141
    %v160 = vld [vmem:[%s4] sm:$0x3]
    %s161 = sld [smem:[#allocation2]]
    %v162 = vstv %s161
    %vm163 = vcmask 588800
    %v165 = vsel %vm163, %v160, 0
    %167 = vmatprep.subr.mxu0 %v143
    %168 = vmatpush1.msra.mxu0 %v142
    %169 = vmatprep.subr.mxu0 %v145
    %170 = vmatpush1.msra.mxu0 %v144
    %171 = vmatprep.subr.mxu0 %v147
    %172 = vmatpush1.msra.mxu0 %v146
    %173 = vmatprep.subr.mxu0 %v149
    %174 = vmatpush1.msra.mxu0 %v148
    %175 = vmatprep.subr.mxu0 %v151
    %176 = vmatpush1.msra.mxu0 %v150
    %177 = vmatprep.subr.mxu0 %v153
    %178 = vmatpush1.msra.mxu0 %v152
    %179 = vmatprep.subr.mxu0 %v155
    %180 = vmatpush1.msra.mxu0 %v154
    %181 = vmatprep.subr.mxu0 %v157
    %182 = vmatpush1.msra.mxu0 %v156
    %183 = vmatprep.subr.mxu0 %v159
    %184 = vmatpush1.msra.mxu0 %v158
    %185 = vmatprep.subr.mxu0 0.0
    %186 = vmatpush1.msra.mxu0 0.0
    %187 = vmatprep.subr.mxu0 0.0
    %188 = vmatpush1.msra.mxu0 0.0
    %189 = vmatprep.subr.mxu0 0.0
    %190 = vmatpush1.msra.mxu0 0.0
    %191 = vmatprep.subr.mxu0 0.0
    %192 = vmatpush1.msra.mxu0 0.0
    %193 = vmatprep.subr.mxu0 0.0
    %194 = vmatpush1.msra.mxu0 0.0
    %195 = vmatprep.subr.mxu0 0.0
    %196 = vmatpush1.msra.mxu0 0.0
    %197 = vmatprep.subr.mxu0 0.0
    %198 = vmatpush1.msra.mxu0 0.0
    %199 = vmatprep.subr.mxu0 0.0
    %200 = vmatpush1.msra.mxu0 0.0
    %201 = vmatprep.subr.mxu0 0.0
    %202 = vmatpush1.msra.mxu0 0.0
    %203 = vmatprep.subr.mxu0 0.0
    %204 = vmatpush1.msra.mxu0 0.0
    %205 = vmatprep.subr.mxu0 0.0
    %206 = vmatpush1.msra.mxu0 0.0
    %207 = vmatprep.subr.mxu0 0.0
    %208 = vmatpush1.msra.mxu0 0.0
    %209 = vmatprep.subr.mxu0 0.0
    %210 = vmatpush1.msra.mxu0 0.0
    %211 = vmatprep.subr.mxu0 0.0
    %212 = vmatpush1.msra.mxu0 0.0
    %213 = vmatprep.subr.mxu0 0.0
    %214 = vmatpush1.msra.mxu0 0.0
    %215 = vmatprep.subr.mxu0 0.0
    %216 = vmatpush1.msra.mxu0 0.0
    %217 = vmatprep.subr.mxu0 0.0
    %218 = vmatpush1.msra.mxu0 0.0
    %219 = vmatprep.subr.mxu0 0.0
    %220 = vmatpush1.msra.mxu0 0.0
    %221 = vmatprep.subr.mxu0 0.0
    %222 = vmatpush1.msra.mxu0 0.0
    %223 = vmatprep.subr.mxu0 0.0
    %224 = vmatpush1.msra.mxu0 0.0
    %225 = vmatprep.subr.mxu0 0.0
    %226 = vmatpush1.msra.mxu0 0.0
    %227 = vmatprep.subr.mxu0 0.0
    %228 = vmatpush1.msra.mxu0 0.0
    %229 = vmatprep.subr.mxu0 0.0
    %230 = vmatpush1.msra.mxu0 0.0
    %231 = vmatprep.mubr.f32.mxu0 0.0
    %232 = vmatmul.mubr.f32.gmra.mrb[0].mxu0 %v165
    %v233 = vpop.f32.mrb[0].mxu0
    %v234 = vadd.f32 %v162, %v233
    %v235 = vpop.f32.mrb[0].mxu0
    %v236 = vadd.f32 %v162, %v235
    %237 = vdwg.mxu0
    %v238 = vmax.f32 %v234, 0.0
    %v239 = vmax.f32 %v236, 0.0
    %240 = vrot.lane.b32.xlu0 %v238, 17
    %v241 = vpop.permute.xlu0 %240
    %242 = vrot.lane.b32.xlu0 %v239, 17
    %v243 = vpop.permute.xlu0 %242
    %v244 = vsel %vm72, %v241, %v243
    %v245 = vsel %vm72, %v243, %v241
    %246 = vrot.lane.b32.xlu0 %v238, 16
    %v247 = vpop.permute.xlu0 %246
    %248 = vrot.lane.b32.xlu0 %v239, 16
    %v249 = vpop.permute.xlu0 %248
    %v250 = vsel %vm79, %v247, %v249
    %v251 = vsel %vm79, %v249, %v247
    %252 = vrot.lane.b32.xlu0 %v238, 15
    %v253 = vpop.permute.xlu0 %252
    %254 = vrot.lane.b32.xlu0 %v239, 15
    %v255 = vpop.permute.xlu0 %254
    %v256 = vsel %vm86, %v253, %v255
    %v257 = vsel %vm86, %v255, %v253
    %258 = vrot.lane.b32.xlu0 %v238, 1
    %v259 = vpop.permute.xlu0 %258
    %260 = vrot.lane.b32.xlu0 %v239, 1
    %v261 = vpop.permute.xlu0 %260
    %v262 = vsel %vm93, %v259, %v261
    %v263 = vsel %vm93, %v261, %v259
    %264 = vrot.lane.b32.xlu0 %v238, 127
    %v265 = vpop.permute.xlu0 %264
    %266 = vrot.lane.b32.xlu0 %v239, 127
    %v267 = vpop.permute.xlu0 %266
    %v268 = vsel %vm100, %v265, %v267
    %v269 = vsel %vm100, %v267, %v265
    %270 = vrot.lane.b32.xlu0 %v238, 113
    %v271 = vpop.permute.xlu0 %270
    %272 = vrot.lane.b32.xlu0 %v239, 113
    %v273 = vpop.permute.xlu0 %272
    %v274 = vsel %vm107, %v271, %v273
    %v275 = vsel %vm107, %v273, %v271
    %276 = vrot.lane.b32.xlu0 %v238, 112
    %v277 = vpop.permute.xlu0 %276
    %278 = vrot.lane.b32.xlu0 %v239, 112
    %v279 = vpop.permute.xlu0 %278
    %v280 = vsel %vm114, %v277, %v279
    %v281 = vsel %vm114, %v279, %v277
    %282 = vrot.lane.b32.xlu0 %v238, 111
    %v283 = vpop.permute.xlu0 %282
    %284 = vrot.lane.b32.xlu0 %v239, 111
    %v285 = vpop.permute.xlu0 %284
    %v286 = vsel %vm121, %v283, %v285
    %v287 = vsel %vm121, %v285, %v283
    %v290 = vrot.slane %v251, 6
    %v291 = vrot.slane %v250, 6
    %v296 = vrot.slane %v257, 4
    %v297 = vrot.slane %v256, 4
    %v302 = vrot.slane %v263, 2
    %v303 = vrot.slane %v262, 2
    %v308 = vrot.slane %v268, 6
    %v309 = vrot.slane %v269, 6
    %v314 = vrot.slane %v274, 4
    %v315 = vrot.slane %v275, 4
    %v320 = vrot.slane %v280, 2
    %v321 = vrot.slane %v281, 2
    %vm324 = vcmask 1041408
    %v325 = vsel %vm324, %v245, %v290
    %v326 = vsel %vm324, %v244, %v291
    %vm327 = vcmask 1043456
    %v328 = vsel %vm327, %v325, %v296
    %v329 = vsel %vm327, %v326, %v297
    %vm330 = vcmask 1045504
    %v331 = vsel %vm330, %v328, %v302
    %v332 = vsel %vm330, %v329, %v303
    %v333 = vsel %vm324, %v238, %v308
    %v334 = vsel %vm324, %v239, %v309
    %v335 = vsel %vm327, %v333, %v314
    %v336 = vsel %vm327, %v334, %v315
    %v337 = vsel %vm330, %v335, %v320
    %v338 = vsel %vm330, %v336, %v321
    %v339 = vld [vmem:[#allocation3] sm:$0xff]
    %v340 = vld [vmem:[#allocation3 + $0x8] sm:$0xff]
    %v341 = vld [vmem:[#allocation3 + $0x10] sm:$0xff]
    %v342 = vld [vmem:[#allocation3 + $0x18] sm:$0xff]
    %v343 = vld [vmem:[#allocation3 + $0x20] sm:$0x3]
    %v344 = vld [vmem:[#allocation3 + $0x28] sm:$0x3]
    %v345 = vmul.f32 %v331, %v339
    %v346 = vmul.f32 %v332, %v340
    %v347 = vmul.f32 %v337, %v341
    %v348 = vmul.f32 %v338, %v342
    %v349 = vmul.f32 %v286, %v343
    %v350 = vmul.f32 %v287, %v344
    %v351 = vld [vmem:[%s6] sm:$0xff]
    %v352 = vld [vmem:[%s6 + $0x8] sm:$0xff]
    %v353 = vld [vmem:[%s6 + $0x10] sm:$0xff]
    %v354 = vld [vmem:[%s6 + $0x18] sm:$0xff]
    %v355 = vld [vmem:[%s6 + $0x20] sm:$0xff]
    %v356 = vld [vmem:[%s6 + $0x28] sm:$0xff]
    %v357 = vld [vmem:[%s6 + $0x30] sm:$0xff]
    %v358 = vld [vmem:[%s6 + $0x38] sm:$0xff]
    %v359 = vld [vmem:[%s7] sm:$0xff]
    %v360 = vld [vmem:[%s7 + $0x8] sm:$0xff]
    %v361 = vld [vmem:[%s7 + $0x10] sm:$0xff]
    %v362 = vld [vmem:[%s7 + $0x18] sm:$0xff]
    %v363 = vld [vmem:[%s7 + $0x20] sm:$0xff]
    %v364 = vld [vmem:[%s7 + $0x28] sm:$0xff]
    %v365 = vld [vmem:[%s7 + $0x30] sm:$0xff]
    %v366 = vld [vmem:[%s7 + $0x38] sm:$0xff]
    %368 = vset.pattern.permute.xlu0 0
    %369 = vperm.xlu0 %368, %v359
    %v370 = vpop.permute.xlu0 %369
    %373 = vset.pattern.permute.xlu0 0
    %374 = vperm.xlu0 %373, %v360
    %v375 = vpop.permute.xlu0 %374
    %378 = vset.pattern.permute.xlu0 0
    %379 = vperm.xlu0 %378, %v361
    %v380 = vpop.permute.xlu0 %379
    %383 = vset.pattern.permute.xlu0 0
    %384 = vperm.xlu0 %383, %v362
    %v385 = vpop.permute.xlu0 %384
    %388 = vset.pattern.permute.xlu0 0
    %389 = vperm.xlu0 %388, %v363
    %v390 = vpop.permute.xlu0 %389
    %393 = vset.pattern.permute.xlu0 0
    %394 = vperm.xlu0 %393, %v364
    %v395 = vpop.permute.xlu0 %394
    %398 = vset.pattern.permute.xlu0 0
    %399 = vperm.xlu0 %398, %v365
    %v400 = vpop.permute.xlu0 %399
    %403 = vset.pattern.permute.xlu0 0
    %404 = vperm.xlu0 %403, %v366
    %v405 = vpop.permute.xlu0 %404
    %vm407 = vcmask 146432
    %v409 = vsel %vm407, %v351, 0
    %v412 = vsel %vm407, %v352, 0
    %v415 = vsel %vm407, %v353, 0
    %v418 = vsel %vm407, %v354, 0
    %v421 = vsel %vm407, %v355, 0
    %v424 = vsel %vm407, %v356, 0
    %v427 = vsel %vm407, %v357, 0
    %v430 = vsel %vm407, %v358, 0
    %v433 = vsel %vm324, %v349, 0
    %v436 = vsel %vm324, %v350, 0
    %438 = vmatprep.subr.mxu0 %v346
    %439 = vmatpush1.msra.mxu0 %v345
    %440 = vmatprep.subr.mxu0 %v348
    %441 = vmatpush1.msra.mxu0 %v347
    %442 = vmatprep.subr.mxu0 %v436
    %443 = vmatpush1.msra.mxu0 %v433
    %444 = vmatprep.subr.mxu0 0.0
    %445 = vmatpush1.msra.mxu0 0.0
    %446 = vmatprep.subr.mxu0 0.0
    %447 = vmatpush1.msra.mxu0 0.0
    %448 = vmatprep.subr.mxu0 0.0
    %449 = vmatpush1.msra.mxu0 0.0
    %450 = vmatprep.subr.mxu0 0.0
    %451 = vmatpush1.msra.mxu0 0.0
    %452 = vmatprep.subr.mxu0 0.0
    %453 = vmatpush1.msra.mxu0 0.0
    %454 = vmatprep.subr.mxu0 0.0
    %455 = vmatpush1.msra.mxu0 0.0
    %456 = vmatprep.subr.mxu0 0.0
    %457 = vmatpush1.msra.mxu0 0.0
    %458 = vmatprep.subr.mxu0 0.0
    %459 = vmatpush1.msra.mxu0 0.0
    %460 = vmatprep.subr.mxu0 0.0
    %461 = vmatpush1.msra.mxu0 0.0
    %462 = vmatprep.subr.mxu0 0.0
    %463 = vmatpush1.msra.mxu0 0.0
    %464 = vmatprep.subr.mxu0 0.0
    %465 = vmatpush1.msra.mxu0 0.0
    %466 = vmatprep.subr.mxu0 0.0
    %467 = vmatpush1.msra.mxu0 0.0
    %468 = vmatprep.subr.mxu0 0.0
    %469 = vmatpush1.msra.mxu0 0.0
    %470 = vmatprep.subr.mxu0 0.0
    %471 = vmatpush1.msra.mxu0 0.0
    %472 = vmatprep.subr.mxu0 0.0
    %473 = vmatpush1.msra.mxu0 0.0
    %474 = vmatprep.subr.mxu0 0.0
    %475 = vmatpush1.msra.mxu0 0.0
    %476 = vmatprep.subr.mxu0 0.0
    %477 = vmatpush1.msra.mxu0 0.0
    %478 = vmatprep.subr.mxu0 0.0
    %479 = vmatpush1.msra.mxu0 0.0
    %480 = vmatprep.subr.mxu0 0.0
    %481 = vmatpush1.msra.mxu0 0.0
    %482 = vmatprep.subr.mxu0 0.0
    %483 = vmatpush1.msra.mxu0 0.0
    %484 = vmatprep.subr.mxu0 0.0
    %485 = vmatpush1.msra.mxu0 0.0
    %486 = vmatprep.subr.mxu0 0.0
    %487 = vmatpush1.msra.mxu0 0.0
    %488 = vmatprep.subr.mxu0 0.0
    %489 = vmatpush1.msra.mxu0 0.0
    %490 = vmatprep.subr.mxu0 0.0
    %491 = vmatpush1.msra.mxu0 0.0
    %492 = vmatprep.subr.mxu0 0.0
    %493 = vmatpush1.msra.mxu0 0.0
    %494 = vmatprep.subr.mxu0 0.0
    %495 = vmatpush1.msra.mxu0 0.0
    %496 = vmatprep.subr.mxu0 0.0
    %497 = vmatpush1.msra.mxu0 0.0
    %498 = vmatprep.subr.mxu0 0.0
    %499 = vmatpush1.msra.mxu0 0.0
    %500 = vmatprep.subr.mxu0 0.0
    %501 = vmatpush1.msra.mxu0 0.0
    %502 = vmatprep.mubr.f32.mxu0 0.0
    %503 = vmatmul.mubr.f32.gmra.mrb[0].mxu0 %v409
    %v504 = vpop.f32.mrb[0].mxu0
    %v505 = vadd.f32 %v370, %v504
    %v506 = vpop.f32.mrb[0].mxu0
    %v507 = vadd.f32 %v370, %v506
    %508 = vmatprep.mubr.f32.mxu0 0.0
    %509 = vmatmul.mubr.f32.gmra.mrb[0].mxu0 %v412
    %v510 = vpop.f32.mrb[0].mxu0
    %v511 = vadd.f32 %v375, %v510
    %v512 = vpop.f32.mrb[0].mxu0
    %v513 = vadd.f32 %v375, %v512
    %514 = vmatprep.mubr.f32.mxu0 0.0
    %515 = vmatmul.mubr.f32.gmra.mrb[0].mxu0 %v415
    %v516 = vpop.f32.mrb[0].mxu0
    %v517 = vadd.f32 %v380, %v516
    %v518 = vpop.f32.mrb[0].mxu0
    %v519 = vadd.f32 %v380, %v518
    %520 = vmatprep.mubr.f32.mxu0 0.0
    %521 = vmatmul.mubr.f32.gmra.mrb[0].mxu0 %v418
    %v522 = vpop.f32.mrb[0].mxu0
    %v523 = vadd.f32 %v385, %v522
    %v524 = vpop.f32.mrb[0].mxu0
    %v525 = vadd.f32 %v385, %v524
    %526 = vmatprep.mubr.f32.mxu0 0.0
    %527 = vmatmul.mubr.f32.gmra.mrb[0].mxu0 %v421
    %v528 = vpop.f32.mrb[0].mxu0
    %v529 = vadd.f32 %v390, %v528
    %v530 = vpop.f32.mrb[0].mxu0
    %v531 = vadd.f32 %v390, %v530
    %532 = vmatprep.mubr.f32.mxu0 0.0
    %533 = vmatmul.mubr.f32.gmra.mrb[0].mxu0 %v424
    %v534 = vpop.f32.mrb[0].mxu0
    %v535 = vadd.f32 %v395, %v534
    %v536 = vpop.f32.mrb[0].mxu0
    %v537 = vadd.f32 %v395, %v536
    %538 = vmatprep.mubr.f32.mxu0 0.0
    %539 = vmatmul.mubr.f32.gmra.mrb[0].mxu0 %v427
    %v540 = vpop.f32.mrb[0].mxu0
    %v541 = vadd.f32 %v400, %v540
    %v542 = vpop.f32.mrb[0].mxu0
    %v543 = vadd.f32 %v400, %v542
    %544 = vmatprep.mubr.f32.mxu0 0.0
    %545 = vmatmul.mubr.f32.gmra.mrb[0].mxu0 %v430
    %v546 = vpop.f32.mrb[0].mxu0
    %v547 = vadd.f32 %v405, %v546
    %v548 = vpop.f32.mrb[0].mxu0
    %v549 = vadd.f32 %v405, %v548
    %550 = vdwg.mxu0
    %v551 = vmax.f32 %v505, 0.0
    %v552 = vmax.f32 %v507, 0.0
    %v553 = vmax.f32 %v511, 0.0
    %v554 = vmax.f32 %v513, 0.0
    %v555 = vmax.f32 %v517, 0.0
    %v556 = vmax.f32 %v519, 0.0
    %v557 = vmax.f32 %v523, 0.0
    %v558 = vmax.f32 %v525, 0.0
    %v559 = vmax.f32 %v529, 0.0
    %v560 = vmax.f32 %v531, 0.0
    %v561 = vmax.f32 %v535, 0.0
    %v562 = vmax.f32 %v537, 0.0
    %v563 = vmax.f32 %v541, 0.0
    %v564 = vmax.f32 %v543, 0.0
    %v565 = vmax.f32 %v547, 0.0
    %v566 = vmax.f32 %v549, 0.0
    %567 = vrot.lane.b32.xlu0 %v551, 127
    %v568 = vpop.permute.xlu0 %567
    %569 = vrot.lane.b32.xlu0 %v553, 127
    %v570 = vpop.permute.xlu0 %569
    %571 = vrot.lane.b32.xlu0 %v555, 127
    %v572 = vpop.permute.xlu0 %571
    %573 = vrot.lane.b32.xlu0 %v557, 127
    %v574 = vpop.permute.xlu0 %573
    %575 = vrot.lane.b32.xlu0 %v559, 127
    %v576 = vpop.permute.xlu0 %575
    %577 = vrot.lane.b32.xlu0 %v561, 127
    %v578 = vpop.permute.xlu0 %577
    %579 = vrot.lane.b32.xlu0 %v563, 127
    %v580 = vpop.permute.xlu0 %579
    %581 = vrot.lane.b32.xlu0 %v565, 127
    %v582 = vpop.permute.xlu0 %581
    %583 = vrot.lane.b32.xlu0 %v552, 127
    %v584 = vpop.permute.xlu0 %583
    %585 = vrot.lane.b32.xlu0 %v554, 127
    %v586 = vpop.permute.xlu0 %585
    %587 = vrot.lane.b32.xlu0 %v556, 127
    %v588 = vpop.permute.xlu0 %587
    %589 = vrot.lane.b32.xlu0 %v558, 127
    %v590 = vpop.permute.xlu0 %589
    %591 = vrot.lane.b32.xlu0 %v560, 127
    %v592 = vpop.permute.xlu0 %591
    %593 = vrot.lane.b32.xlu0 %v562, 127
    %v594 = vpop.permute.xlu0 %593
    %595 = vrot.lane.b32.xlu0 %v564, 127
    %v596 = vpop.permute.xlu0 %595
    %597 = vrot.lane.b32.xlu0 %v566, 127
    %v598 = vpop.permute.xlu0 %597
    %v599 = vsel %vm100, %v568, %v584
    %v600 = vsel %vm100, %v570, %v586
    %v601 = vsel %vm100, %v572, %v588
    %v602 = vsel %vm100, %v574, %v590
    %v603 = vsel %vm100, %v576, %v592
    %v604 = vsel %vm100, %v578, %v594
    %v605 = vsel %vm100, %v580, %v596
    %v606 = vsel %vm100, %v582, %v598
    %v607 = vsel %vm100, %v584, %v568
    %v608 = vsel %vm100, %v586, %v570
    %v609 = vsel %vm100, %v588, %v572
    %v610 = vsel %vm100, %v590, %v574
    %v611 = vsel %vm100, %v592, %v576
    %v612 = vsel %vm100, %v594, %v578
    %v613 = vsel %vm100, %v596, %v580
    %v614 = vsel %vm100, %v598, %v582
    %v615 = vmax.f32 %v551, %v599
    %v616 = vmax.f32 %v552, %v607
    %v617 = vmax.f32 %v553, %v600
    %v618 = vmax.f32 %v554, %v608
    %v619 = vmax.f32 %v555, %v601
    %v620 = vmax.f32 %v556, %v609
    %v621 = vmax.f32 %v557, %v602
    %v622 = vmax.f32 %v558, %v610
    %v623 = vmax.f32 %v559, %v603
    %v624 = vmax.f32 %v560, %v611
    %v625 = vmax.f32 %v561, %v604
    %v626 = vmax.f32 %v562, %v612
    %v627 = vmax.f32 %v563, %v605
    %v628 = vmax.f32 %v564, %v613
    %v629 = vmax.f32 %v565, %v606
    %v630 = vmax.f32 %v566, %v614
    %631 = vrot.lane.b32.xlu0 %v551, 112
    %v632 = vpop.permute.xlu0 %631
    %633 = vrot.lane.b32.xlu0 %v553, 112
    %v634 = vpop.permute.xlu0 %633
    %635 = vrot.lane.b32.xlu0 %v555, 112
    %v636 = vpop.permute.xlu0 %635
    %637 = vrot.lane.b32.xlu0 %v557, 112
    %v638 = vpop.permute.xlu0 %637
    %639 = vrot.lane.b32.xlu0 %v559, 112
    %v640 = vpop.permute.xlu0 %639
    %641 = vrot.lane.b32.xlu0 %v561, 112
    %v642 = vpop.permute.xlu0 %641
    %643 = vrot.lane.b32.xlu0 %v563, 112
    %v644 = vpop.permute.xlu0 %643
    %645 = vrot.lane.b32.xlu0 %v565, 112
    %v646 = vpop.permute.xlu0 %645
    %647 = vrot.lane.b32.xlu0 %v552, 112
    %v648 = vpop.permute.xlu0 %647
    %649 = vrot.lane.b32.xlu0 %v554, 112
    %v650 = vpop.permute.xlu0 %649
    %651 = vrot.lane.b32.xlu0 %v556, 112
    %v652 = vpop.permute.xlu0 %651
    %653 = vrot.lane.b32.xlu0 %v558, 112
    %v654 = vpop.permute.xlu0 %653
    %655 = vrot.lane.b32.xlu0 %v560, 112
    %v656 = vpop.permute.xlu0 %655
    %657 = vrot.lane.b32.xlu0 %v562, 112
    %v658 = vpop.permute.xlu0 %657
    %659 = vrot.lane.b32.xlu0 %v564, 112
    %v660 = vpop.permute.xlu0 %659
    %661 = vrot.lane.b32.xlu0 %v566, 112
    %v662 = vpop.permute.xlu0 %661
    %v663 = vsel %vm114, %v632, %v648
    %v664 = vsel %vm114, %v634, %v650
    %v665 = vsel %vm114, %v636, %v652
    %v666 = vsel %vm114, %v638, %v654
    %v667 = vsel %vm114, %v640, %v656
    %v668 = vsel %vm114, %v642, %v658
    %v669 = vsel %vm114, %v644, %v660
    %v670 = vsel %vm114, %v646, %v662
    %v671 = vsel %vm114, %v648, %v632
    %v672 = vsel %vm114, %v650, %v634
    %v673 = vsel %vm114, %v652, %v636
    %v674 = vsel %vm114, %v654, %v638
    %v675 = vsel %vm114, %v656, %v640
    %v676 = vsel %vm114, %v658, %v642
    %v677 = vsel %vm114, %v660, %v644
    %v678 = vsel %vm114, %v662, %v646
    %679 = vrot.lane.b32.xlu0 %v551, 111
    %v680 = vpop.permute.xlu0 %679
    %681 = vrot.lane.b32.xlu0 %v553, 111
    %v682 = vpop.permute.xlu0 %681
    %683 = vrot.lane.b32.xlu0 %v555, 111
    %v684 = vpop.permute.xlu0 %683
    %685 = vrot.lane.b32.xlu0 %v557, 111
    %v686 = vpop.permute.xlu0 %685
    %687 = vrot.lane.b32.xlu0 %v559, 111
    %v688 = vpop.permute.xlu0 %687
    %689 = vrot.lane.b32.xlu0 %v561, 111
    %v690 = vpop.permute.xlu0 %689
    %691 = vrot.lane.b32.xlu0 %v563, 111
    %v692 = vpop.permute.xlu0 %691
    %693 = vrot.lane.b32.xlu0 %v565, 111
    %v694 = vpop.permute.xlu0 %693
    %695 = vrot.lane.b32.xlu0 %v552, 111
    %v696 = vpop.permute.xlu0 %695
    %697 = vrot.lane.b32.xlu0 %v554, 111
    %v698 = vpop.permute.xlu0 %697
    %699 = vrot.lane.b32.xlu0 %v556, 111
    %v700 = vpop.permute.xlu0 %699
    %701 = vrot.lane.b32.xlu0 %v558, 111
    %v702 = vpop.permute.xlu0 %701
    %703 = vrot.lane.b32.xlu0 %v560, 111
    %v704 = vpop.permute.xlu0 %703
    %705 = vrot.lane.b32.xlu0 %v562, 111
    %v706 = vpop.permute.xlu0 %705
    %707 = vrot.lane.b32.xlu0 %v564, 111
    %v708 = vpop.permute.xlu0 %707
    %709 = vrot.lane.b32.xlu0 %v566, 111
    %v710 = vpop.permute.xlu0 %709
    %v711 = vsel %vm121, %v680, %v696
    %v712 = vsel %vm121, %v682, %v698
    %v713 = vsel %vm121, %v684, %v700
    %v714 = vsel %vm121, %v686, %v702
    %v715 = vsel %vm121, %v688, %v704
    %v716 = vsel %vm121, %v690, %v706
    %v717 = vsel %vm121, %v692, %v708
    %v718 = vsel %vm121, %v694, %v710
    %v719 = vsel %vm121, %v696, %v680
    %v720 = vsel %vm121, %v698, %v682
    %v721 = vsel %vm121, %v700, %v684
    %v722 = vsel %vm121, %v702, %v686
    %v723 = vsel %vm121, %v704, %v688
    %v724 = vsel %vm121, %v706, %v690
    %v725 = vsel %vm121, %v708, %v692
    %v726 = vsel %vm121, %v710, %v694
    %v727 = vmax.f32 %v663, %v711
    %v728 = vmax.f32 %v671, %v719
    %v729 = vmax.f32 %v664, %v712
    %v730 = vmax.f32 %v672, %v720
    %v731 = vmax.f32 %v665, %v713
    %v732 = vmax.f32 %v673, %v721
    %v733 = vmax.f32 %v666, %v714
    %v734 = vmax.f32 %v674, %v722
    %v735 = vmax.f32 %v667, %v715
    %v736 = vmax.f32 %v675, %v723
    %v737 = vmax.f32 %v668, %v716
    %v738 = vmax.f32 %v676, %v724
    %v739 = vmax.f32 %v669, %v717
    %v740 = vmax.f32 %v677, %v725
    %v741 = vmax.f32 %v670, %v718
    %v742 = vmax.f32 %v678, %v726
    %v743 = vmax.f32 %v615, %v727
    %v744 = vmax.f32 %v616, %v728
    %v745 = vmax.f32 %v617, %v729
    %v746 = vmax.f32 %v618, %v730
    %v747 = vmax.f32 %v619, %v731
    %v748 = vmax.f32 %v620, %v732
    %v749 = vmax.f32 %v621, %v733
    %v750 = vmax.f32 %v622, %v734
    %v751 = vmax.f32 %v623, %v735
    %v752 = vmax.f32 %v624, %v736
    %v753 = vmax.f32 %v625, %v737
    %v754 = vmax.f32 %v626, %v738
    %v755 = vmax.f32 %v627, %v739
    %v756 = vmax.f32 %v628, %v740
    %v757 = vmax.f32 %v629, %v741
    %v758 = vmax.f32 %v630, %v742
    %v759 = vld [vmem:[#allocation5] sm:$0xff]
    %v760 = vld [vmem:[#allocation5 + $0x8] sm:$0xff]
    %v761 = vld [vmem:[#allocation5 + $0x10] sm:$0xff]
    %v762 = vld [vmem:[#allocation5 + $0x18] sm:$0xff]
    %v763 = vld [vmem:[#allocation5 + $0x20] sm:$0xff]
    %v764 = vld [vmem:[#allocation5 + $0x28] sm:$0xff]
    %v765 = vld [vmem:[#allocation5 + $0x30] sm:$0xff]
    %v766 = vld [vmem:[#allocation5 + $0x38] sm:$0xff]
    %v767 = vld [vmem:[#allocation5 + $0x40] sm:$0xff]
    %v768 = vld [vmem:[#allocation5 + $0x48] sm:$0xff]
    %v769 = vld [vmem:[#allocation5 + $0x50] sm:$0xff]
    %v770 = vld [vmem:[#allocation5 + $0x58] sm:$0xff]
    %v771 = vld [vmem:[#allocation5 + $0x60] sm:$0xff]
    %v772 = vld [vmem:[#allocation5 + $0x68] sm:$0xff]
    %v773 = vld [vmem:[#allocation5 + $0x70] sm:$0xff]
    %v774 = vld [vmem:[#allocation5 + $0x78] sm:$0xff]
    %775 = vmatprep.subr.mxu0 %v744
    %776 = vmatpush1.xpose.msra.mxu0 %v743
    %777 = vmatprep.subr.mxu0 %v746
    %778 = vmatpush1.xpose.msra.mxu0 %v745
    %779 = vmatprep.subr.mxu0 %v748
    %780 = vmatpush1.xpose.msra.mxu0 %v747
    %781 = vmatprep.subr.mxu0 %v750
    %782 = vmatpush1.xpose.msra.mxu0 %v749
    %783 = vmatprep.subr.mxu0 %v752
    %784 = vmatpush1.xpose.msra.mxu0 %v751
    %785 = vmatprep.subr.mxu0 %v754
    %786 = vmatpush1.xpose.msra.mxu0 %v753
    %787 = vmatprep.subr.mxu0 %v756
    %788 = vmatpush1.xpose.msra.mxu0 %v755
    %789 = vmatprep.subr.mxu0 %v758
    %790 = vmatpush1.xpose.msra.mxu0 %v757
    %791 = vmatprep.subr.mxu0 0.0
    %792 = vmatpush1.xpose.msra.mxu0 0.0
    %793 = vmatprep.subr.mxu0 0.0
    %794 = vmatpush1.xpose.msra.mxu0 0.0
    %795 = vmatprep.subr.mxu0 0.0
    %796 = vmatpush1.xpose.msra.mxu0 0.0
    %797 = vmatprep.subr.mxu0 0.0
    %798 = vmatpush1.xpose.msra.mxu0 0.0
    %799 = vmatprep.subr.mxu0 0.0
    %800 = vmatpush1.xpose.msra.mxu0 0.0
    %801 = vmatprep.subr.mxu0 0.0
    %802 = vmatpush1.xpose.msra.mxu0 0.0
    %803 = vmatprep.subr.mxu0 0.0
    %804 = vmatpush1.xpose.msra.mxu0 0.0
    %805 = vmatprep.subr.mxu0 0.0
    %806 = vmatpush1.xpose.msra.mxu0 0.0
    %807 = vmatprep.subr.mxu0 0.0
    %808 = vmatpush1.xpose.msra.mxu0 0.0
    %809 = vmatprep.subr.mxu0 0.0
    %810 = vmatpush1.xpose.msra.mxu0 0.0
    %811 = vmatprep.subr.mxu0 0.0
    %812 = vmatpush1.xpose.msra.mxu0 0.0
    %813 = vmatprep.subr.mxu0 0.0
    %814 = vmatpush1.xpose.msra.mxu0 0.0
    %815 = vmatprep.subr.mxu0 0.0
    %816 = vmatpush1.xpose.msra.mxu0 0.0
    %817 = vmatprep.subr.mxu0 0.0
    %818 = vmatpush1.xpose.msra.mxu0 0.0
    %819 = vmatprep.subr.mxu0 0.0
    %820 = vmatpush1.xpose.msra.mxu0 0.0
    %821 = vmatprep.subr.mxu0 0.0
    %822 = vmatpush1.xpose.msra.mxu0 0.0
    %823 = vmatprep.subr.mxu0 0.0
    %824 = vmatpush1.xpose.msra.mxu0 0.0
    %825 = vmatprep.subr.mxu0 0.0
    %826 = vmatpush1.xpose.msra.mxu0 0.0
    %827 = vmatprep.subr.mxu0 0.0
    %828 = vmatpush1.xpose.msra.mxu0 0.0
    %829 = vmatprep.subr.mxu0 0.0
    %830 = vmatpush1.xpose.msra.mxu0 0.0
    %831 = vmatprep.subr.mxu0 0.0
    %832 = vmatpush1.xpose.msra.mxu0 0.0
    %833 = vmatprep.subr.mxu0 0.0
    %834 = vmatpush1.xpose.msra.mxu0 0.0
    %835 = vmatprep.subr.mxu0 0.0
    %836 = vmatpush1.xpose.msra.mxu0 0.0
    %837 = vmatprep.subr.mxu0 0.0
    %838 = vmatpush1.xpose.msra.mxu0 0.0
    %839 = vmatprep.mubr.f32.mxu0 %v760
    %840 = vmatmul.mubr.f32.gmra.mrb[0].mxu0 %v759
    %v841 = vpop.f32.mrb[0].mxu0
    %v842 = vadd.f32 0.0, %v841
    %v843 = vpop.f32.mrb[0].mxu0
    %844 = vmatprep.mubr.f32.mxu0 %v762
    %845 = vmatmul.mubr.f32.gmra.mrb[0].mxu0 %v761
    %v846 = vpop.f32.mrb[0].mxu0
    %v847 = vadd.f32 0.0, %v846
    %v848 = vpop.f32.mrb[0].mxu0
    %849 = vmatprep.mubr.f32.mxu0 %v764
    %850 = vmatmul.mubr.f32.gmra.mrb[0].mxu0 %v763
    %v851 = vpop.f32.mrb[0].mxu0
    %v852 = vadd.f32 0.0, %v851
    %v853 = vpop.f32.mrb[0].mxu0
    %854 = vmatprep.mubr.f32.mxu0 %v766
    %855 = vmatmul.mubr.f32.gmra.mrb[0].mxu0 %v765
    %v856 = vpop.f32.mrb[0].mxu0
    %v857 = vadd.f32 0.0, %v856
    %v858 = vpop.f32.mrb[0].mxu0
    %859 = vmatprep.mubr.f32.mxu0 %v768
    %860 = vmatmul.mubr.f32.gmra.mrb[0].mxu0 %v767
    %v861 = vpop.f32.mrb[0].mxu0
    %v862 = vadd.f32 0.0, %v861
    %v863 = vpop.f32.mrb[0].mxu0
    %864 = vmatprep.mubr.f32.mxu0 %v770
    %865 = vmatmul.mubr.f32.gmra.mrb[0].mxu0 %v769
    %v866 = vpop.f32.mrb[0].mxu0
    %v867 = vadd.f32 0.0, %v866
    %v868 = vpop.f32.mrb[0].mxu0
    %869 = vmatprep.mubr.f32.mxu0 %v772
    %870 = vmatmul.mubr.f32.gmra.mrb[0].mxu0 %v771
    %v871 = vpop.f32.mrb[0].mxu0
    %v872 = vadd.f32 0.0, %v871
    %v873 = vpop.f32.mrb[0].mxu0
    %874 = vmatprep.mubr.f32.mxu0 %v774
    %875 = vmatmul.mubr.f32.gmra.mrb[0].mxu0 %v773
    %v876 = vpop.f32.mrb[0].mxu0
    %v877 = vadd.f32 0.0, %v876
    %v878 = vpop.f32.mrb[0].mxu0
    %879 = vdwg.mxu0
    %v880 = vld [vmem:[%s8] sm:$0x1]
    %v881 = vld [vmem:[%s9] sm:$0x1]
    %vm882 = vcmask 261120
    %v883 = vsel %vm882, %v842, 0.0
    %884 = vadd.xlane.f32.xlu0 %v883
    %v885 = vpop.xlane.xlu0 %884
    %v886 = vsel %vm882, %v847, 0.0
    %887 = vadd.xlane.f32.xlu0 %v886
    %v888 = vpop.xlane.xlu0 %887
    %v889 = vsel %vm882, %v852, 0.0
    %890 = vadd.xlane.f32.xlu0 %v889
    %v891 = vpop.xlane.xlu0 %890
    %v892 = vsel %vm882, %v857, 0.0
    %893 = vadd.xlane.f32.xlu0 %v892
    %v894 = vpop.xlane.xlu0 %893
    %v895 = vsel %vm882, %v862, 0.0
    %896 = vadd.xlane.f32.xlu0 %v895
    %v897 = vpop.xlane.xlu0 %896
    %v898 = vsel %vm882, %v867, 0.0
    %899 = vadd.xlane.f32.xlu0 %v898
    %v900 = vpop.xlane.xlu0 %899
    %v901 = vsel %vm882, %v872, 0.0
    %902 = vadd.xlane.f32.xlu0 %v901
    %v903 = vpop.xlane.xlu0 %902
    %v904 = vsel %vm882, %v877, 0.0
    %905 = vadd.xlane.f32.xlu0 %v904
    %v906 = vpop.xlane.xlu0 %905
    %v907 = vrcp.pop 32.0
    %v908 = vmul.f32 %v885, %v907
    %v909 = vmul.f32 %v888, %v907
    %v910 = vmul.f32 %v891, %v907
    %v911 = vmul.f32 %v894, %v907
    %v912 = vmul.f32 %v897, %v907
    %v913 = vmul.f32 %v900, %v907
    %v914 = vmul.f32 %v903, %v907
    %v915 = vmul.f32 %v906, %v907
    %v916 = vsub.f32 %v842, %v908
    %v917 = vsub.f32 %v847, %v909
    %v918 = vsub.f32 %v852, %v910
    %v919 = vsub.f32 %v857, %v911
    %v920 = vsub.f32 %v862, %v912
    %v921 = vsub.f32 %v867, %v913
    %v922 = vsub.f32 %v872, %v914
    %v923 = vsub.f32 %v877, %v915
    %v924 = vmul.f32 %v916, %v916
    %v925 = vmul.f32 %v917, %v917
    %v926 = vmul.f32 %v918, %v918
    %v927 = vmul.f32 %v919, %v919
    %v928 = vmul.f32 %v920, %v920
    %v929 = vmul.f32 %v921, %v921
    %v930 = vmul.f32 %v922, %v922
    %v931 = vmul.f32 %v923, %v923
    %v932 = vsel %vm882, %v924, 0.0
    %933 = vadd.xlane.f32.xlu0 %v932
    %v934 = vpop.xlane.xlu0 %933
    %v935 = vsel %vm882, %v925, 0.0
    %936 = vadd.xlane.f32.xlu0 %v935
    %v937 = vpop.xlane.xlu0 %936
    %v938 = vsel %vm882, %v926, 0.0
    %939 = vadd.xlane.f32.xlu0 %v938
    %v940 = vpop.xlane.xlu0 %939
    %v941 = vsel %vm882, %v927, 0.0
    %942 = vadd.xlane.f32.xlu0 %v941
    %v943 = vpop.xlane.xlu0 %942
    %v944 = vsel %vm882, %v928, 0.0
    %945 = vadd.xlane.f32.xlu0 %v944
    %v946 = vpop.xlane.xlu0 %945
    %v947 = vsel %vm882, %v929, 0.0
    %948 = vadd.xlane.f32.xlu0 %v947
    %v949 = vpop.xlane.xlu0 %948
    %v950 = vsel %vm882, %v930, 0.0
    %951 = vadd.xlane.f32.xlu0 %v950
    %v952 = vpop.xlane.xlu0 %951
    %v953 = vsel %vm882, %v931, 0.0
    %954 = vadd.xlane.f32.xlu0 %v953
    %v955 = vpop.xlane.xlu0 %954
    %v956 = vmul.f32 %v934, %v907
    %v957 = vmul.f32 %v937, %v907
    %v958 = vmul.f32 %v940, %v907
    %v959 = vmul.f32 %v943, %v907
    %v960 = vmul.f32 %v946, %v907
    %v961 = vmul.f32 %v949, %v907
    %v962 = vmul.f32 %v952, %v907
    %v963 = vmul.f32 %v955, %v907
    %v964 = vadd.f32 %v956, 1e-05
    %v965 = vadd.f32 %v957, 1e-05
    %v966 = vadd.f32 %v958, 1e-05
    %v967 = vadd.f32 %v959, 1e-05
    %v968 = vadd.f32 %v960, 1e-05
    %v969 = vadd.f32 %v961, 1e-05
    %v970 = vadd.f32 %v962, 1e-05
    %v971 = vadd.f32 %v963, 1e-05
    %v972 = vrsqrt.pop %v964
    %v973 = vrsqrt.pop %v965
    %v974 = vrsqrt.pop %v966
    %v975 = vrsqrt.pop %v967
    %v976 = vrsqrt.pop %v968
    %v977 = vrsqrt.pop %v969
    %v978 = vrsqrt.pop %v970
    %v979 = vrsqrt.pop %v971
    %v980 = vmul.f32 %v916, %v972
    %v981 = vmul.f32 %v917, %v973
    %v982 = vmul.f32 %v918, %v974
    %v983 = vmul.f32 %v919, %v975
    %v984 = vmul.f32 %v920, %v976
    %v985 = vmul.f32 %v921, %v977
    %v986 = vmul.f32 %v922, %v978
    %v987 = vmul.f32 %v923, %v979
    %v989 = vlaneseq
    %v990 = vshrl.u32 %v989, 7
    %v991 = vsub.s32 0, %v990
    %v992 = vrot.slane %v880, %v991
    %v994 = vmul.f32 %v980, %v992
    %v995 = vmul.f32 %v981, %v992
    %v996 = vmul.f32 %v982, %v992
    %v997 = vmul.f32 %v983, %v992
    %v998 = vmul.f32 %v984, %v992
    %v999 = vmul.f32 %v985, %v992
    %v1000 = vmul.f32 %v986, %v992
    %v1001 = vmul.f32 %v987, %v992
    %v1003 = vlaneseq
    %v1004 = vshrl.u32 %v1003, 7
    %v1005 = vsub.s32 0, %v1004
    %v1006 = vrot.slane %v881, %v1005
    %v1008 = vadd.f32 %v994, %v1006
    %v1009 = vadd.f32 %v995, %v1006
    %v1010 = vadd.f32 %v996, %v1006
    %v1011 = vadd.f32 %v997, %v1006
    %v1012 = vadd.f32 %v998, %v1006
    %v1013 = vadd.f32 %v999, %v1006
    %v1014 = vadd.f32 %v1000, %v1006
    %v1015 = vadd.f32 %v1001, %v1006
    %1016 = vst.msk [vmem:[%s10] sm:$0xff] %vm882, %v1008
    %1017 = vst.msk [vmem:[%s10 + $0x8] sm:$0xff] %vm882, %v1009
    %1018 = vst.msk [vmem:[%s10 + $0x10] sm:$0xff] %vm882, %v1010
    %1019 = vst.msk [vmem:[%s10 + $0x18] sm:$0xff] %vm882, %v1011
    %1020 = vst.msk [vmem:[%s10 + $0x20] sm:$0xff] %vm882, %v1012
    %1021 = vst.msk [vmem:[%s10 + $0x28] sm:$0xff] %vm882, %v1013
    %1022 = vst.msk [vmem:[%s10 + $0x30] sm:$0xff] %vm882, %v1014
    %1023 = vst.msk [vmem:[%s10 + $0x38] sm:$0xff] %vm882, %v1015
    %1032 = vrot.lane.b32.xlu0 %v842, 96
    %v1033 = vpop.permute.xlu0 %1032
    %1034 = vrot.lane.b32.xlu0 %v847, 96
    %v1035 = vpop.permute.xlu0 %1034
    %1036 = vrot.lane.b32.xlu0 %v852, 96
    %v1037 = vpop.permute.xlu0 %1036
    %1038 = vrot.lane.b32.xlu0 %v857, 96
    %v1039 = vpop.permute.xlu0 %1038
    %1040 = vrot.lane.b32.xlu0 %v862, 96
    %v1041 = vpop.permute.xlu0 %1040
    %1042 = vrot.lane.b32.xlu0 %v867, 96
    %v1043 = vpop.permute.xlu0 %1042
    %1044 = vrot.lane.b32.xlu0 %v872, 96
    %v1045 = vpop.permute.xlu0 %1044
    %1046 = vrot.lane.b32.xlu0 %v877, 96
    %v1047 = vpop.permute.xlu0 %1046
    %v1056 = vsel %vm882, %v1033, 0.0
    %1057 = vadd.xlane.f32.xlu0 %v1056
    %v1058 = vpop.xlane.xlu0 %1057
    %v1059 = vsel %vm882, %v1035, 0.0
    %1060 = vadd.xlane.f32.xlu0 %v1059
    %v1061 = vpop.xlane.xlu0 %1060
    %v1062 = vsel %vm882, %v1037, 0.0
    %1063 = vadd.xlane.f32.xlu0 %v1062
    %v1064 = vpop.xlane.xlu0 %1063
    %v1065 = vsel %vm882, %v1039, 0.0
    %1066 = vadd.xlane.f32.xlu0 %v1065
    %v1067 = vpop.xlane.xlu0 %1066
    %v1068 = vsel %vm882, %v1041, 0.0
    %1069 = vadd.xlane.f32.xlu0 %v1068
    %v1070 = vpop.xlane.xlu0 %1069
    %v1071 = vsel %vm882, %v1043, 0.0
    %1072 = vadd.xlane.f32.xlu0 %v1071
    %v1073 = vpop.xlane.xlu0 %1072
    %v1074 = vsel %vm882, %v1045, 0.0
    %1075 = vadd.xlane.f32.xlu0 %v1074
    %v1076 = vpop.xlane.xlu0 %1075
    %v1077 = vsel %vm882, %v1047, 0.0
    %1078 = vadd.xlane.f32.xlu0 %v1077
    %v1079 = vpop.xlane.xlu0 %1078
    %v1080 = vmul.f32 %v1058, %v907
    %v1081 = vmul.f32 %v1061, %v907
    %v1082 = vmul.f32 %v1064, %v907
    %v1083 = vmul.f32 %v1067, %v907
    %v1084 = vmul.f32 %v1070, %v907
    %v1085 = vmul.f32 %v1073, %v907
    %v1086 = vmul.f32 %v1076, %v907
    %v1087 = vmul.f32 %v1079, %v907
    %v1088 = vsub.f32 %v842, %v1080
    %v1089 = vsub.f32 %v847, %v1081
    %v1090 = vsub.f32 %v852, %v1082
    %v1091 = vsub.f32 %v857, %v1083
    %v1092 = vsub.f32 %v862, %v1084
    %v1093 = vsub.f32 %v867, %v1085
    %v1094 = vsub.f32 %v872, %v1086
    %v1095 = vsub.f32 %v877, %v1087
    %v1096 = vmul.f32 %v1088, %v1088
    %v1097 = vmul.f32 %v1089, %v1089
    %v1098 = vmul.f32 %v1090, %v1090
    %v1099 = vmul.f32 %v1091, %v1091
    %v1100 = vmul.f32 %v1092, %v1092
    %v1101 = vmul.f32 %v1093, %v1093
    %v1102 = vmul.f32 %v1094, %v1094
    %v1103 = vmul.f32 %v1095, %v1095
    %1112 = vrot.lane.b32.xlu0 %v1096, 96
    %v1113 = vpop.permute.xlu0 %1112
    %1114 = vrot.lane.b32.xlu0 %v1097, 96
    %v1115 = vpop.permute.xlu0 %1114
    %1116 = vrot.lane.b32.xlu0 %v1098, 96
    %v1117 = vpop.permute.xlu0 %1116
    %1118 = vrot.lane.b32.xlu0 %v1099, 96
    %v1119 = vpop.permute.xlu0 %1118
    %1120 = vrot.lane.b32.xlu0 %v1100, 96
    %v1121 = vpop.permute.xlu0 %1120
    %1122 = vrot.lane.b32.xlu0 %v1101, 96
    %v1123 = vpop.permute.xlu0 %1122
    %1124 = vrot.lane.b32.xlu0 %v1102, 96
    %v1125 = vpop.permute.xlu0 %1124
    %1126 = vrot.lane.b32.xlu0 %v1103, 96
    %v1127 = vpop.permute.xlu0 %1126
    %v1136 = vsel %vm882, %v1113, 0.0
    %1137 = vadd.xlane.f32.xlu0 %v1136
    %v1138 = vpop.xlane.xlu0 %1137
    %v1139 = vsel %vm882, %v1115, 0.0
    %1140 = vadd.xlane.f32.xlu0 %v1139
    %v1141 = vpop.xlane.xlu0 %1140
    %v1142 = vsel %vm882, %v1117, 0.0
    %1143 = vadd.xlane.f32.xlu0 %v1142
    %v1144 = vpop.xlane.xlu0 %1143
    %v1145 = vsel %vm882, %v1119, 0.0
    %1146 = vadd.xlane.f32.xlu0 %v1145
    %v1147 = vpop.xlane.xlu0 %1146
    %v1148 = vsel %vm882, %v1121, 0.0
    %1149 = vadd.xlane.f32.xlu0 %v1148
    %v1150 = vpop.xlane.xlu0 %1149
    %v1151 = vsel %vm882, %v1123, 0.0
    %1152 = vadd.xlane.f32.xlu0 %v1151
    %v1153 = vpop.xlane.xlu0 %1152
    %v1154 = vsel %vm882, %v1125, 0.0
    %1155 = vadd.xlane.f32.xlu0 %v1154
    %v1156 = vpop.xlane.xlu0 %1155
    %v1157 = vsel %vm882, %v1127, 0.0
    %1158 = vadd.xlane.f32.xlu0 %v1157
    %v1159 = vpop.xlane.xlu0 %1158
    %v1160 = vmul.f32 %v1138, %v907
    %v1161 = vmul.f32 %v1141, %v907
    %v1162 = vmul.f32 %v1144, %v907
    %v1163 = vmul.f32 %v1147, %v907
    %v1164 = vmul.f32 %v1150, %v907
    %v1165 = vmul.f32 %v1153, %v907
    %v1166 = vmul.f32 %v1156, %v907
    %v1167 = vmul.f32 %v1159, %v907
    %v1168 = vadd.f32 %v1160, 1e-05
    %v1169 = vadd.f32 %v1161, 1e-05
    %v1170 = vadd.f32 %v1162, 1e-05
    %v1171 = vadd.f32 %v1163, 1e-05
    %v1172 = vadd.f32 %v1164, 1e-05
    %v1173 = vadd.f32 %v1165, 1e-05
    %v1174 = vadd.f32 %v1166, 1e-05
    %v1175 = vadd.f32 %v1167, 1e-05
    %v1176 = vrsqrt.pop %v1168
    %v1177 = vrsqrt.pop %v1169
    %v1178 = vrsqrt.pop %v1170
    %v1179 = vrsqrt.pop %v1171
    %v1180 = vrsqrt.pop %v1172
    %v1181 = vrsqrt.pop %v1173
    %v1182 = vrsqrt.pop %v1174
    %v1183 = vrsqrt.pop %v1175
    %v1184 = vmul.f32 %v1088, %v1176
    %v1185 = vmul.f32 %v1089, %v1177
    %v1186 = vmul.f32 %v1090, %v1178
    %v1187 = vmul.f32 %v1091, %v1179
    %v1188 = vmul.f32 %v1092, %v1180
    %v1189 = vmul.f32 %v1093, %v1181
    %v1190 = vmul.f32 %v1094, %v1182
    %v1191 = vmul.f32 %v1095, %v1183
    %1192 = vrot.lane.b32.xlu0 %v992, 32
    %v1193 = vpop.permute.xlu0 %1192
    %v1195 = vmul.f32 %v1184, %v1193
    %v1196 = vmul.f32 %v1185, %v1193
    %v1197 = vmul.f32 %v1186, %v1193
    %v1198 = vmul.f32 %v1187, %v1193
    %v1199 = vmul.f32 %v1188, %v1193
    %v1200 = vmul.f32 %v1189, %v1193
    %v1201 = vmul.f32 %v1190, %v1193
    %v1202 = vmul.f32 %v1191, %v1193
    %1203 = vrot.lane.b32.xlu0 %v1006, 32
    %v1204 = vpop.permute.xlu0 %1203
    %v1206 = vadd.f32 %v1195, %v1204
    %v1207 = vadd.f32 %v1196, %v1204
    %v1208 = vadd.f32 %v1197, %v1204
    %v1209 = vadd.f32 %v1198, %v1204
    %v1210 = vadd.f32 %v1199, %v1204
    %v1211 = vadd.f32 %v1200, %v1204
    %v1212 = vadd.f32 %v1201, %v1204
    %v1213 = vadd.f32 %v1202, %v1204
    %1222 = vrot.lane.b32.xlu0 %v1206, 96
    %v1223 = vpop.permute.xlu0 %1222
    %1224 = vrot.lane.b32.xlu0 %v1207, 96
    %v1225 = vpop.permute.xlu0 %1224
    %1226 = vrot.lane.b32.xlu0 %v1208, 96
    %v1227 = vpop.permute.xlu0 %1226
    %1228 = vrot.lane.b32.xlu0 %v1209, 96
    %v1229 = vpop.permute.xlu0 %1228
    %1230 = vrot.lane.b32.xlu0 %v1210, 96
    %v1231 = vpop.permute.xlu0 %1230
    %1232 = vrot.lane.b32.xlu0 %v1211, 96
    %v1233 = vpop.permute.xlu0 %1232
    %1234 = vrot.lane.b32.xlu0 %v1212, 96
    %v1235 = vpop.permute.xlu0 %1234
    %1236 = vrot.lane.b32.xlu0 %v1213, 96
    %v1237 = vpop.permute.xlu0 %1236
    %s1246 = scalar_lea.vmem %s10, 64
    %1247 = vst.msk [vmem:[%s1246] sm:$0xff] %vm882, %v1223
    %1248 = vst.msk [vmem:[%s1246 + $0x8] sm:$0xff] %vm882, %v1225
    %1249 = vst.msk [vmem:[%s1246 + $0x10] sm:$0xff] %vm882, %v1227
    %1250 = vst.msk [vmem:[%s1246 + $0x18] sm:$0xff] %vm882, %v1229
    %1251 = vst.msk [vmem:[%s1246 + $0x20] sm:$0xff] %vm882, %v1231
    %1252 = vst.msk [vmem:[%s1246 + $0x28] sm:$0xff] %vm882, %v1233
    %1253 = vst.msk [vmem:[%s1246 + $0x30] sm:$0xff] %vm882, %v1235
    %1254 = vst.msk [vmem:[%s1246 + $0x38] sm:$0xff] %vm882, %v1237
    // Predicated region
    $region50: #{tpu_custom_call.1} parent=1 // pred_check
      _
    $region51: #{tpu_custom_call.1} parent=1 // pred_check_branch
      %1256 = sbr.rel (0) target = $region53
    $region52: #{tpu_custom_call.1} parent=1 // pred_region
      _
    $region53: #{tpu_custom_call.1} parent=1 // pred_fallthru
      _
    // Predicated region
    $region54: #{tpu_custom_call.1} parent=1 // pred_check
      _
    $region55: #{tpu_custom_call.1} parent=1 // pred_check_branch
      %1258 = sbr.rel (0) target = $region57
    $region56: #{tpu_custom_call.1} parent=1 // pred_region
      _
    $region57: #{tpu_custom_call.1} parent=1 // pred_fallthru
      _
    %1259 = vsyncpa [#allocation4], 1
    %1260 = vsyncpa [#allocation6], 1

</llo_original>
